<compile_context>
chip_gen: v7x
topology: tpu7x:2x2x1
jax: 0.10.0
libtpu: 0.0.40
codegen_flags: <defaults>
</compile_context>

<pallas_src>
import functools

import jax
import jax.numpy as jnp
from jax.experimental import pallas as pl
from jax.experimental.pallas import tpu as pltpu


# ---------------------------------------------------------------------------
# Fused kernel: all GRU layers + final FC in a single invocation.
# refs layout: x, [w_ih, w_hh, b_in(folded), b_hn] * num_layers, w_fc, b_fc,
#              out, scratch
# ---------------------------------------------------------------------------
def _gru_fc_kernel(x_ref, *refs, num_layers, hidden_dim, seq_len):
    H, T = hidden_dim, seq_len
    layer_refs = refs[: 4 * num_layers]
    wfc_ref = refs[4 * num_layers + 0]
    bfc_ref = refs[4 * num_layers + 1]
    o_ref = refs[4 * num_layers + 2]
    seq_scr = refs[4 * num_layers + 3]          # VMEM (T*Bb, H), time-major rows

    x = x_ref[...]                              # (T*Bb, D) time-major, f32, VMEM
    TB = x.shape[0]
    Bb = TB // T

    h = None
    for layer in range(num_layers):
        w_ih = layer_refs[4 * layer + 0][...]   # (Din, 3H)
        w_hh = layer_refs[4 * layer + 1][...]   # (H,   3H)
        b_in = layer_refs[4 * layer + 2][...]   # (1,   3H)  = b_ih + [b_hr, b_hz, 0]
        b_hn = layer_refs[4 * layer + 3][...]   # (1,   H)

        # Layer input: original x for layer 0, previous layer's hidden sequence
        # (kept in VMEM scratch, never written to HBM) afterwards.
        seq = x if layer == 0 else seq_scr[...]                     # (T*Bb, Din)

        # ---- hoisted input projection: one GEMM over all timesteps, folded bias
        gi = jnp.dot(seq, w_ih, preferred_element_type=jnp.float32) + b_in
        #    gi: (T*Bb, 3H), time-major -> per-step reads are contiguous row slabs

        is_last = layer == num_layers - 1

        def step(h_prev, gi_t):
            # ONE fused (Bb,H)@(H,3H) recurrent matmul per step (was 3 per-gate).
            gh = jnp.dot(h_prev, w_hh, preferred_element_type=jnp.float32)
            r = jax.nn.sigmoid(gi_t[:, 0 * H:1 * H] + gh[:, 0 * H:1 * H])
            z = jax.nn.sigmoid(gi_t[:, 1 * H:2 * H] + gh[:, 1 * H:2 * H])
            n = jnp.tanh(gi_t[:, 2 * H:3 * H] + r * (gh[:, 2 * H:3 * H] + b_hn))
            return (1.0 - z) * n + z * h_prev

        h = jnp.zeros((Bb, H), jnp.float32)     # h0 = zeros (matches torch)
        if T <= 32:
            # Short sequences: full static unroll (max LLO scheduler visibility).
            for t in range(T):
                h = step(h, gi[t * Bb:(t + 1) * Bb, :])
                if not is_last:
                    seq_scr[t * Bb:(t + 1) * Bb, :] = h
        else:
            # Longer sequences: modest unroll bounds vreg live ranges / compile time.
            def body(t, h_prev):
                row = pl.multiple_of(t * Bb, Bb)
                gi_t = jax.lax.dynamic_slice_in_dim(gi, row, Bb, axis=0)
                h_new = step(h_prev, gi_t)
                if not is_last:
                    seq_scr[pl.ds(row, Bb), :] = h_new
                return h_new
            h = jax.lax.fori_loop(0, T, body, h, unroll=4)

    # ---- fused final Linear on the last timestep of the last layer ----------
    o_ref[...] = (jnp.dot(h, wfc_ref[...], preferred_element_type=jnp.float32)
                  + bfc_ref[...])


def gru_fc_forward(params, x_btd):
    """x_btd: (B, T, input_dim) -> (B, output_dim). Single fused pallas_call."""
    x = x_btd.astype(jnp.float32)
    B, T, D = x.shape
    layers = params["layers"]
    L = len(layers)
    H = layers[0]["w_hh_t"].shape[0]
    O = params["w_fc_t"].shape[1]

    # Batch grid block: at toy B this degenerates to a single grid step; at scale
    # it splits the batch into 8-aligned chunks so v7x's 2 TCs both get work.
    bb = B
    for cand in (256, 128, 64, 32, 16, 8):
        if B >= cand and B % cand == 0:
            bb = cand
            break
    n_b = B // bb

    # Wrapper-side layout plumbing (cheap XLA ops, tiny input tensor):
    #   (B, T, D) -> (n_b, T*bb, D), time-major inside each batch block, so the
    #   kernel only ever touches contiguous 2-D lane-dense slabs (no in-kernel
    #   reshapes/transposes).
    x_blk = (x.reshape(n_b, bb, T, D)
              .transpose(0, 2, 1, 3)
              .reshape(n_b, T * bb, D))

    flat_inputs = [x_blk]
    in_specs = [pl.BlockSpec((None, T * bb, D), lambda b: (b, 0, 0))]
    for lp in layers:
        b_ih, b_hh = lp["b_ih"], lp["b_hh"]
        # Fold b_hh_r / b_hh_z into the input-projection bias (b_hh_n stays in-loop).
        b_in = b_ih + jnp.concatenate(
            [b_hh[:, :2 * H], jnp.zeros((1, H), b_hh.dtype)], axis=-1)
        b_hn = b_hh[:, 2 * H:]
        for a in (lp["w_ih_t"], lp["w_hh_t"], b_in, b_hn):
            flat_inputs.append(a)
            in_specs.append(pl.BlockSpec(a.shape, lambda b: (0, 0)))
    b_fc = params["b_fc"].reshape(1, O)
    for a in (params["w_fc_t"], b_fc):
        flat_inputs.append(a)
        in_specs.append(pl.BlockSpec(a.shape, lambda b: (0, 0)))

    # Explicit VMEM budget: x block + weights (double-buffered) + gi intermediate
    # + time-major scratch + output, with headroom; clamp to [32 MiB, 100 MiB].
    weight_bytes = sum(int(a.size) * 4 for a in flat_inputs[1:])
    block_bytes = 4 * (T * bb * max(D, H)     # layer input slab
                       + T * bb * 3 * H       # gi
                       + T * bb * H           # scratch
                       + bb * O)
    vmem_limit = int(min(max(2 * (2 * weight_bytes + 2 * block_bytes), 32 << 20),
                         100 << 20))

    kernel = functools.partial(_gru_fc_kernel, num_layers=L, hidden_dim=H,
                               seq_len=T)
    return pl.pallas_call(
        kernel,
        out_shape=jax.ShapeDtypeStruct((B, O), jnp.float32),
        grid_spec=pltpu.PrefetchScalarGridSpec(
            num_scalar_prefetch=0,
            grid=(n_b,),
            in_specs=in_specs,
            out_specs=pl.BlockSpec((bb, O), lambda b: (b, 0)),
            scratch_shapes=[pltpu.VMEM((T * bb, H), jnp.float32)],
        ),
        compiler_params=pltpu.CompilerParams(
            dimension_semantics=("parallel",),
            vmem_limit_bytes=vmem_limit,
        ),
    )(*flat_inputs)


gru_forward = jax.jit(gru_fc_forward)


# ---------------------------------------------------------------------------
# Parameter init (deterministic, PyTorch-style U(-1/sqrt(H), 1/sqrt(H)))
# ---------------------------------------------------------------------------
def init_params(key, input_dim, hidden_dim, num_layers, output_dim):
    k = 1.0 / jnp.sqrt(hidden_dim)
    params = {"layers": []}
    for layer in range(num_layers):
        d_in = input_dim if layer == 0 else hidden_dim
        key, k1, k2, k3, k4 = jax.random.split(key, 5)
        params["layers"].append({
            # stored transposed: (d_in, 3H) / (H, 3H); gate order (r, z, n)
            "w_ih_t": jax.random.uniform(k1, (d_in, 3 * hidden_dim), jnp.float32, -k, k),
            "w_hh_t": jax.random.uniform(k2, (hidden_dim, 3 * hidden_dim), jnp.float32, -k, k),
            "b_ih": jax.random.uniform(k3, (1, 3 * hidden_dim), jnp.float32, -k, k),
            "b_hh": jax.random.uniform(k4, (1, 3 * hidden_dim), jnp.float32, -k, k),
        })
    key, k1, k2 = jax.random.split(key, 3)
    kf = 1.0 / jnp.sqrt(hidden_dim)
    params["w_fc_t"] = jax.random.uniform(k1, (hidden_dim, output_dim), jnp.float32, -kf, kf)
    params["b_fc"] = jax.random.uniform(k2, (output_dim,), jnp.float32, -kf, kf)
    return params


# ---------------------------------------------------------------------------
# Pure-JAX reference (silent sanity check)
# ---------------------------------------------------------------------------
def gru_forward_ref(params, x_btd):
    h_seq = jnp.transpose(x_btd, (1, 0, 2)).astype(jnp.float32)   # (T, B, D)
    for lp in params["layers"]:
        H = lp["w_hh_t"].shape[0]

        def step(h, x_t):
            gi = x_t @ lp["w_ih_t"] + lp["b_ih"]
            gh = h @ lp["w_hh_t"] + lp["b_hh"]
            r = jax.nn.sigmoid(gi[:, :H] + gh[:, :H])
            z = jax.nn.sigmoid(gi[:, H:2 * H] + gh[:, H:2 * H])
            n = jnp.tanh(gi[:, 2 * H:] + r * gh[:, 2 * H:])
            h_new = (1.0 - z) * n + z * h
            return h_new, h_new

        B = h_seq.shape[1]
        _, h_seq = jax.lax.scan(step, jnp.zeros((B, H), jnp.float32), h_seq)
    return h_seq[-1] @ params["w_fc_t"] + params["b_fc"]


if __name__ == "__main__":
    # Small shapes: batch=2, seq=8, input_dim=8, hidden=32, layers=2, output=1
    B, T, INPUT_DIM, HIDDEN_DIM, NUM_LAYERS, OUTPUT_DIM = 2, 8, 8, 32, 2, 1

    key = jax.random.PRNGKey(0)
    pkey, xkey = jax.random.split(key)
    params = init_params(pkey, INPUT_DIM, HIDDEN_DIM, NUM_LAYERS, OUTPUT_DIM)
    x = jax.random.normal(xkey, (B, T, INPUT_DIM), dtype=jnp.float32)

    out = gru_forward(params, x)
    out = jax.block_until_ready(out)

    ref = gru_forward_ref(params, x)
    assert out.shape == (B, OUTPUT_DIM)
    assert jnp.allclose(out, ref, atol=1e-4, rtol=1e-4), (out, ref)

    print("KERNEL_OK")
</pallas_src>

<mosaic_0001>
module attributes {stable_mosaic.version = 11 : i64} {
  func.func @_gru_fc_kernel(%arg0: i32, %arg1: memref<1x16x8xf32, #tpu.memory_space<vmem>>, %arg2: memref<8x96xf32, #tpu.memory_space<vmem>>, %arg3: memref<32x96xf32, #tpu.memory_space<vmem>>, %arg4: memref<1x96xf32, #tpu.memory_space<vmem>>, %arg5: memref<1x32xf32, #tpu.memory_space<vmem>>, %arg6: memref<32x96xf32, #tpu.memory_space<vmem>>, %arg7: memref<32x96xf32, #tpu.memory_space<vmem>>, %arg8: memref<1x96xf32, #tpu.memory_space<vmem>>, %arg9: memref<1x32xf32, #tpu.memory_space<vmem>>, %arg10: memref<32x1xf32, #tpu.memory_space<vmem>>, %arg11: memref<1x1xf32, #tpu.memory_space<vmem>>, %arg12: memref<2x1xf32, #tpu.memory_space<vmem>>, %arg13: memref<16x32xf32, #tpu.memory_space<vmem>>) attributes {dimension_semantics = [#tpu.dimension_semantics<parallel>], iteration_bounds = array<i64: 1>, scalar_prefetch = 0 : i64, scratch_operands = 1 : i64, tpu.core_type = #tpu.core_type<tc>, window_params = [{transform_indices = @transform_0, window_bounds = array<i64: 1, 16, 8>}, {pipeline_mode = #tpu.pipeline_mode<synchronous>, transform_indices = @transform_1, window_bounds = array<i64: 8, 96>}, {pipeline_mode = #tpu.pipeline_mode<synchronous>, transform_indices = @transform_2, window_bounds = array<i64: 32, 96>}, {pipeline_mode = #tpu.pipeline_mode<synchronous>, transform_indices = @transform_3, window_bounds = array<i64: 1, 96>}, {pipeline_mode = #tpu.pipeline_mode<synchronous>, transform_indices = @transform_4, window_bounds = array<i64: 1, 32>}, {pipeline_mode = #tpu.pipeline_mode<synchronous>, transform_indices = @transform_5, window_bounds = array<i64: 32, 96>}, {pipeline_mode = #tpu.pipeline_mode<synchronous>, transform_indices = @transform_6, window_bounds = array<i64: 32, 96>}, {pipeline_mode = #tpu.pipeline_mode<synchronous>, transform_indices = @transform_7, window_bounds = array<i64: 1, 96>}, {pipeline_mode = #tpu.pipeline_mode<synchronous>, transform_indices = @transform_8, window_bounds = array<i64: 1, 32>}, {pipeline_mode = #tpu.pipeline_mode<synchronous>, transform_indices = @transform_9, window_bounds = array<i64: 32, 1>}, {pipeline_mode = #tpu.pipeline_mode<synchronous>, transform_indices = @transform_10, window_bounds = array<i64: 1, 1>}, {transform_indices = @transform_11, window_bounds = array<i64: 2, 1>}]} {
    %c0 = arith.constant 0 : index
    %c0_0 = arith.constant 0 : index
    %c0_1 = arith.constant 0 : index
    %0 = vector.load %arg1[%c0, %c0_0, %c0_1] : memref<1x16x8xf32, #tpu.memory_space<vmem>>, vector<1x16x8xf32>
    %1 = vector.shape_cast %0 : vector<1x16x8xf32> to vector<16x8xf32>
    %c0_2 = arith.constant 0 : index
    %c0_3 = arith.constant 0 : index
    %2 = vector.load %arg2[%c0_2, %c0_3] : memref<8x96xf32, #tpu.memory_space<vmem>>, vector<8x96xf32>
    %c0_4 = arith.constant 0 : index
    %c0_5 = arith.constant 0 : index
    %3 = vector.load %arg3[%c0_4, %c0_5] : memref<32x96xf32, #tpu.memory_space<vmem>>, vector<32x96xf32>
    %c0_6 = arith.constant 0 : index
    %c0_7 = arith.constant 0 : index
    %4 = vector.load %arg4[%c0_6, %c0_7] : memref<1x96xf32, #tpu.memory_space<vmem>>, vector<1x96xf32>
    %c0_8 = arith.constant 0 : index
    %c0_9 = arith.constant 0 : index
    %5 = vector.load %arg5[%c0_8, %c0_9] : memref<1x32xf32, #tpu.memory_space<vmem>>, vector<1x32xf32>
    %cst = arith.constant dense<0.000000e+00> : vector<16x96xf32>
    %6 = tpu.matmul %1, %2, %cst {dimension_numbers = #tpu.dot_dimension_numbers<[1], [0], [0], [1], [0, 0, 1, 1], [], []>} : vector<16x8xf32>, vector<8x96xf32>, vector<16x96xf32> -> vector<16x96xf32>
    %7 = vector.broadcast %4 : vector<1x96xf32> to vector<16x96xf32>
    %8 = arith.addf %6, %7 : vector<16x96xf32>
    %cst_10 = arith.constant 0.000000e+00 : f32
    %9 = vector.broadcast %cst_10 : f32 to vector<2x32xf32>
    %10 = vector.extract_strided_slice %8 {offsets = [0, 0], sizes = [2, 96], strides = [1, 1]} : vector<16x96xf32> to vector<2x96xf32>
    %cst_11 = arith.constant dense<0.000000e+00> : vector<2x96xf32>
    %11 = tpu.matmul %9, %3, %cst_11 {dimension_numbers = #tpu.dot_dimension_numbers<[1], [0], [0], [1], [0, 0, 1, 1], [], []>} : vector<2x32xf32>, vector<32x96xf32>, vector<2x96xf32> -> vector<2x96xf32>
    %12 = vector.extract_strided_slice %10 {offsets = [0, 0], sizes = [2, 32], strides = [1, 1]} : vector<2x96xf32> to vector<2x32xf32>
    %13 = vector.extract_strided_slice %11 {offsets = [0, 0], sizes = [2, 32], strides = [1, 1]} : vector<2x96xf32> to vector<2x32xf32>
    %14 = arith.addf %12, %13 : vector<2x32xf32>
    %15 = arith.negf %14 : vector<2x32xf32>
    %16 = math.exp %15 : vector<2x32xf32>
    %cst_12 = arith.constant 1.000000e+00 : f32
    %17 = vector.broadcast %cst_12 : f32 to vector<2x32xf32>
    %18 = arith.addf %17, %16 : vector<2x32xf32>
    %19 = arith.divf %17, %18 : vector<2x32xf32>
    %20 = vector.extract_strided_slice %10 {offsets = [0, 32], sizes = [2, 32], strides = [1, 1]} : vector<2x96xf32> to vector<2x32xf32>
    %21 = vector.extract_strided_slice %11 {offsets = [0, 32], sizes = [2, 32], strides = [1, 1]} : vector<2x96xf32> to vector<2x32xf32>
    %22 = arith.addf %20, %21 : vector<2x32xf32>
    %23 = arith.negf %22 : vector<2x32xf32>
    %24 = math.exp %23 : vector<2x32xf32>
    %cst_13 = arith.constant 1.000000e+00 : f32
    %25 = vector.broadcast %cst_13 : f32 to vector<2x32xf32>
    %26 = arith.addf %25, %24 : vector<2x32xf32>
    %27 = arith.divf %25, %26 : vector<2x32xf32>
    %28 = vector.extract_strided_slice %10 {offsets = [0, 64], sizes = [2, 32], strides = [1, 1]} : vector<2x96xf32> to vector<2x32xf32>
    %29 = vector.extract_strided_slice %11 {offsets = [0, 64], sizes = [2, 32], strides = [1, 1]} : vector<2x96xf32> to vector<2x32xf32>
    %30 = vector.broadcast %5 : vector<1x32xf32> to vector<2x32xf32>
    %31 = arith.addf %29, %30 : vector<2x32xf32>
    %32 = arith.mulf %19, %31 : vector<2x32xf32>
    %33 = arith.addf %28, %32 : vector<2x32xf32>
    %34 = math.tanh %33 : vector<2x32xf32>
    %cst_14 = arith.constant 1.000000e+00 : f32
    %35 = vector.broadcast %cst_14 : f32 to vector<2x32xf32>
    %36 = arith.subf %35, %27 : vector<2x32xf32>
    %37 = arith.mulf %36, %34 : vector<2x32xf32>
    %38 = arith.mulf %27, %9 : vector<2x32xf32>
    %39 = arith.addf %37, %38 : vector<2x32xf32>
    %c0_15 = arith.constant 0 : index
    %c0_16 = arith.constant 0 : index
    %40 = vector.load %arg13[%c0_15, %c0_16] : memref<16x32xf32, #tpu.memory_space<vmem>>, vector<2x32xf32>
    tpu.vector_store %arg13[%c0_15, %c0_16], %39 {strides = array<i32>} : memref<16x32xf32, #tpu.memory_space<vmem>>, vector<2x32xf32>,
    %41 = vector.extract_strided_slice %8 {offsets = [2, 0], sizes = [2, 96], strides = [1, 1]} : vector<16x96xf32> to vector<2x96xf32>
    %cst_17 = arith.constant dense<0.000000e+00> : vector<2x96xf32>
    %42 = tpu.matmul %39, %3, %cst_17 {dimension_numbers = #tpu.dot_dimension_numbers<[1], [0], [0], [1], [0, 0, 1, 1], [], []>} : vector<2x32xf32>, vector<32x96xf32>, vector<2x96xf32> -> vector<2x96xf32>
    %43 = vector.extract_strided_slice %41 {offsets = [0, 0], sizes = [2, 32], strides = [1, 1]} : vector<2x96xf32> to vector<2x32xf32>
    %44 = vector.extract_strided_slice %42 {offsets = [0, 0], sizes = [2, 32], strides = [1, 1]} : vector<2x96xf32> to vector<2x32xf32>
    %45 = arith.addf %43, %44 : vector<2x32xf32>
    %46 = arith.negf %45 : vector<2x32xf32>
    %47 = math.exp %46 : vector<2x32xf32>
    %cst_18 = arith.constant 1.000000e+00 : f32
    %48 = vector.broadcast %cst_18 : f32 to vector<2x32xf32>
    %49 = arith.addf %48, %47 : vector<2x32xf32>
    %50 = arith.divf %48, %49 : vector<2x32xf32>
    %51 = vector.extract_strided_slice %41 {offsets = [0, 32], sizes = [2, 32], strides = [1, 1]} : vector<2x96xf32> to vector<2x32xf32>
    %52 = vector.extract_strided_slice %42 {offsets = [0, 32], sizes = [2, 32], strides = [1, 1]} : vector<2x96xf32> to vector<2x32xf32>
    %53 = arith.addf %51, %52 : vector<2x32xf32>
    %54 = arith.negf %53 : vector<2x32xf32>
    %55 = math.exp %54 : vector<2x32xf32>
    %cst_19 = arith.constant 1.000000e+00 : f32
    %56 = vector.broadcast %cst_19 : f32 to vector<2x32xf32>
    %57 = arith.addf %56, %55 : vector<2x32xf32>
    %58 = arith.divf %56, %57 : vector<2x32xf32>
    %59 = vector.extract_strided_slice %41 {offsets = [0, 64], sizes = [2, 32], strides = [1, 1]} : vector<2x96xf32> to vector<2x32xf32>
    %60 = vector.extract_strided_slice %42 {offsets = [0, 64], sizes = [2, 32], strides = [1, 1]} : vector<2x96xf32> to vector<2x32xf32>
    %61 = vector.broadcast %5 : vector<1x32xf32> to vector<2x32xf32>
    %62 = arith.addf %60, %61 : vector<2x32xf32>
    %63 = arith.mulf %50, %62 : vector<2x32xf32>
    %64 = arith.addf %59, %63 : vector<2x32xf32>
    %65 = math.tanh %64 : vector<2x32xf32>
    %cst_20 = arith.constant 1.000000e+00 : f32
    %66 = vector.broadcast %cst_20 : f32 to vector<2x32xf32>
    %67 = arith.subf %66, %58 : vector<2x32xf32>
    %68 = arith.mulf %67, %65 : vector<2x32xf32>
    %69 = arith.mulf %58, %39 : vector<2x32xf32>
    %70 = arith.addf %68, %69 : vector<2x32xf32>
    %c2 = arith.constant 2 : index
    %c0_21 = arith.constant 0 : index
    %71 = vector.load %arg13[%c2, %c0_21] : memref<16x32xf32, #tpu.memory_space<vmem>>, vector<2x32xf32>
    tpu.vector_store %arg13[%c2, %c0_21], %70 {strides = array<i32>} : memref<16x32xf32, #tpu.memory_space<vmem>>, vector<2x32xf32>,
    %72 = vector.extract_strided_slice %8 {offsets = [4, 0], sizes = [2, 96], strides = [1, 1]} : vector<16x96xf32> to vector<2x96xf32>
    %cst_22 = arith.constant dense<0.000000e+00> : vector<2x96xf32>
    %73 = tpu.matmul %70, %3, %cst_22 {dimension_numbers = #tpu.dot_dimension_numbers<[1], [0], [0], [1], [0, 0, 1, 1], [], []>} : vector<2x32xf32>, vector<32x96xf32>, vector<2x96xf32> -> vector<2x96xf32>
    %74 = vector.extract_strided_slice %72 {offsets = [0, 0], sizes = [2, 32], strides = [1, 1]} : vector<2x96xf32> to vector<2x32xf32>
    %75 = vector.extract_strided_slice %73 {offsets = [0, 0], sizes = [2, 32], strides = [1, 1]} : vector<2x96xf32> to vector<2x32xf32>
    %76 = arith.addf %74, %75 : vector<2x32xf32>
    %77 = arith.negf %76 : vector<2x32xf32>
    %78 = math.exp %77 : vector<2x32xf32>
    %cst_23 = arith.constant 1.000000e+00 : f32
    %79 = vector.broadcast %cst_23 : f32 to vector<2x32xf32>
    %80 = arith.addf %79, %78 : vector<2x32xf32>
    %81 = arith.divf %79, %80 : vector<2x32xf32>
    %82 = vector.extract_strided_slice %72 {offsets = [0, 32], sizes = [2, 32], strides = [1, 1]} : vector<2x96xf32> to vector<2x32xf32>
    %83 = vector.extract_strided_slice %73 {offsets = [0, 32], sizes = [2, 32], strides = [1, 1]} : vector<2x96xf32> to vector<2x32xf32>
    %84 = arith.addf %82, %83 : vector<2x32xf32>
    %85 = arith.negf %84 : vector<2x32xf32>
    %86 = math.exp %85 : vector<2x32xf32>
    %cst_24 = arith.constant 1.000000e+00 : f32
    %87 = vector.broadcast %cst_24 : f32 to vector<2x32xf32>
    %88 = arith.addf %87, %86 : vector<2x32xf32>
    %89 = arith.divf %87, %88 : vector<2x32xf32>
    %90 = vector.extract_strided_slice %72 {offsets = [0, 64], sizes = [2, 32], strides = [1, 1]} : vector<2x96xf32> to vector<2x32xf32>
    %91 = vector.extract_strided_slice %73 {offsets = [0, 64], sizes = [2, 32], strides = [1, 1]} : vector<2x96xf32> to vector<2x32xf32>
    %92 = vector.broadcast %5 : vector<1x32xf32> to vector<2x32xf32>
    %93 = arith.addf %91, %92 : vector<2x32xf32>
    %94 = arith.mulf %81, %93 : vector<2x32xf32>
    %95 = arith.addf %90, %94 : vector<2x32xf32>
    %96 = math.tanh %95 : vector<2x32xf32>
    %cst_25 = arith.constant 1.000000e+00 : f32
    %97 = vector.broadcast %cst_25 : f32 to vector<2x32xf32>
    %98 = arith.subf %97, %89 : vector<2x32xf32>
    %99 = arith.mulf %98, %96 : vector<2x32xf32>
    %100 = arith.mulf %89, %70 : vector<2x32xf32>
    %101 = arith.addf %99, %100 : vector<2x32xf32>
    %c4 = arith.constant 4 : index
    %c0_26 = arith.constant 0 : index
    %102 = vector.load %arg13[%c4, %c0_26] : memref<16x32xf32, #tpu.memory_space<vmem>>, vector<2x32xf32>
    tpu.vector_store %arg13[%c4, %c0_26], %101 {strides = array<i32>} : memref<16x32xf32, #tpu.memory_space<vmem>>, vector<2x32xf32>,
    %103 = vector.extract_strided_slice %8 {offsets = [6, 0], sizes = [2, 96], strides = [1, 1]} : vector<16x96xf32> to vector<2x96xf32>
    %cst_27 = arith.constant dense<0.000000e+00> : vector<2x96xf32>
    %104 = tpu.matmul %101, %3, %cst_27 {dimension_numbers = #tpu.dot_dimension_numbers<[1], [0], [0], [1], [0, 0, 1, 1], [], []>} : vector<2x32xf32>, vector<32x96xf32>, vector<2x96xf32> -> vector<2x96xf32>
    %105 = vector.extract_strided_slice %103 {offsets = [0, 0], sizes = [2, 32], strides = [1, 1]} : vector<2x96xf32> to vector<2x32xf32>
    %106 = vector.extract_strided_slice %104 {offsets = [0, 0], sizes = [2, 32], strides = [1, 1]} : vector<2x96xf32> to vector<2x32xf32>
    %107 = arith.addf %105, %106 : vector<2x32xf32>
    %108 = arith.negf %107 : vector<2x32xf32>
    %109 = math.exp %108 : vector<2x32xf32>
    %cst_28 = arith.constant 1.000000e+00 : f32
    %110 = vector.broadcast %cst_28 : f32 to vector<2x32xf32>
    %111 = arith.addf %110, %109 : vector<2x32xf32>
    %112 = arith.divf %110, %111 : vector<2x32xf32>
    %113 = vector.extract_strided_slice %103 {offsets = [0, 32], sizes = [2, 32], strides = [1, 1]} : vector<2x96xf32> to vector<2x32xf32>
    %114 = vector.extract_strided_slice %104 {offsets = [0, 32], sizes = [2, 32], strides = [1, 1]} : vector<2x96xf32> to vector<2x32xf32>
    %115 = arith.addf %113, %114 : vector<2x32xf32>
    %116 = arith.negf %115 : vector<2x32xf32>
    %117 = math.exp %116 : vector<2x32xf32>
    %cst_29 = arith.constant 1.000000e+00 : f32
    %118 = vector.broadcast %cst_29 : f32 to vector<2x32xf32>
    %119 = arith.addf %118, %117 : vector<2x32xf32>
    %120 = arith.divf %118, %119 : vector<2x32xf32>
    %121 = vector.extract_strided_slice %103 {offsets = [0, 64], sizes = [2, 32], strides = [1, 1]} : vector<2x96xf32> to vector<2x32xf32>
    %122 = vector.extract_strided_slice %104 {offsets = [0, 64], sizes = [2, 32], strides = [1, 1]} : vector<2x96xf32> to vector<2x32xf32>
    %123 = vector.broadcast %5 : vector<1x32xf32> to vector<2x32xf32>
    %124 = arith.addf %122, %123 : vector<2x32xf32>
    %125 = arith.mulf %112, %124 : vector<2x32xf32>
    %126 = arith.addf %121, %125 : vector<2x32xf32>
    %127 = math.tanh %126 : vector<2x32xf32>
    %cst_30 = arith.constant 1.000000e+00 : f32
    %128 = vector.broadcast %cst_30 : f32 to vector<2x32xf32>
    %129 = arith.subf %128, %120 : vector<2x32xf32>
    %130 = arith.mulf %129, %127 : vector<2x32xf32>
    %131 = arith.mulf %120, %101 : vector<2x32xf32>
    %132 = arith.addf %130, %131 : vector<2x32xf32>
    %c6 = arith.constant 6 : index
    %c0_31 = arith.constant 0 : index
    %133 = vector.load %arg13[%c6, %c0_31] : memref<16x32xf32, #tpu.memory_space<vmem>>, vector<2x32xf32>
    tpu.vector_store %arg13[%c6, %c0_31], %132 {strides = array<i32>} : memref<16x32xf32, #tpu.memory_space<vmem>>, vector<2x32xf32>,
    %134 = vector.extract_strided_slice %8 {offsets = [8, 0], sizes = [2, 96], strides = [1, 1]} : vector<16x96xf32> to vector<2x96xf32>
    %cst_32 = arith.constant dense<0.000000e+00> : vector<2x96xf32>
    %135 = tpu.matmul %132, %3, %cst_32 {dimension_numbers = #tpu.dot_dimension_numbers<[1], [0], [0], [1], [0, 0, 1, 1], [], []>} : vector<2x32xf32>, vector<32x96xf32>, vector<2x96xf32> -> vector<2x96xf32>
    %136 = vector.extract_strided_slice %134 {offsets = [0, 0], sizes = [2, 32], strides = [1, 1]} : vector<2x96xf32> to vector<2x32xf32>
    %137 = vector.extract_strided_slice %135 {offsets = [0, 0], sizes = [2, 32], strides = [1, 1]} : vector<2x96xf32> to vector<2x32xf32>
    %138 = arith.addf %136, %137 : vector<2x32xf32>
    %139 = arith.negf %138 : vector<2x32xf32>
    %140 = math.exp %139 : vector<2x32xf32>
    %cst_33 = arith.constant 1.000000e+00 : f32
    %141 = vector.broadcast %cst_33 : f32 to vector<2x32xf32>
    %142 = arith.addf %141, %140 : vector<2x32xf32>
    %143 = arith.divf %141, %142 : vector<2x32xf32>
    %144 = vector.extract_strided_slice %134 {offsets = [0, 32], sizes = [2, 32], strides = [1, 1]} : vector<2x96xf32> to vector<2x32xf32>
    %145 = vector.extract_strided_slice %135 {offsets = [0, 32], sizes = [2, 32], strides = [1, 1]} : vector<2x96xf32> to vector<2x32xf32>
    %146 = arith.addf %144, %145 : vector<2x32xf32>
    %147 = arith.negf %146 : vector<2x32xf32>
    %148 = math.exp %147 : vector<2x32xf32>
    %cst_34 = arith.constant 1.000000e+00 : f32
    %149 = vector.broadcast %cst_34 : f32 to vector<2x32xf32>
    %150 = arith.addf %149, %148 : vector<2x32xf32>
    %151 = arith.divf %149, %150 : vector<2x32xf32>
    %152 = vector.extract_strided_slice %134 {offsets = [0, 64], sizes = [2, 32], strides = [1, 1]} : vector<2x96xf32> to vector<2x32xf32>
    %153 = vector.extract_strided_slice %135 {offsets = [0, 64], sizes = [2, 32], strides = [1, 1]} : vector<2x96xf32> to vector<2x32xf32>
    %154 = vector.broadcast %5 : vector<1x32xf32> to vector<2x32xf32>
    %155 = arith.addf %153, %154 : vector<2x32xf32>
    %156 = arith.mulf %143, %155 : vector<2x32xf32>
    %157 = arith.addf %152, %156 : vector<2x32xf32>
    %158 = math.tanh %157 : vector<2x32xf32>
    %cst_35 = arith.constant 1.000000e+00 : f32
    %159 = vector.broadcast %cst_35 : f32 to vector<2x32xf32>
    %160 = arith.subf %159, %151 : vector<2x32xf32>
    %161 = arith.mulf %160, %158 : vector<2x32xf32>
    %162 = arith.mulf %151, %132 : vector<2x32xf32>
    %163 = arith.addf %161, %162 : vector<2x32xf32>
    %c8 = arith.constant 8 : index
    %c0_36 = arith.constant 0 : index
    %164 = vector.load %arg13[%c8, %c0_36] : memref<16x32xf32, #tpu.memory_space<vmem>>, vector<2x32xf32>
    tpu.vector_store %arg13[%c8, %c0_36], %163 {strides = array<i32>} : memref<16x32xf32, #tpu.memory_space<vmem>>, vector<2x32xf32>,
    %165 = vector.extract_strided_slice %8 {offsets = [10, 0], sizes = [2, 96], strides = [1, 1]} : vector<16x96xf32> to vector<2x96xf32>
    %cst_37 = arith.constant dense<0.000000e+00> : vector<2x96xf32>
    %166 = tpu.matmul %163, %3, %cst_37 {dimension_numbers = #tpu.dot_dimension_numbers<[1], [0], [0], [1], [0, 0, 1, 1], [], []>} : vector<2x32xf32>, vector<32x96xf32>, vector<2x96xf32> -> vector<2x96xf32>
    %167 = vector.extract_strided_slice %165 {offsets = [0, 0], sizes = [2, 32], strides = [1, 1]} : vector<2x96xf32> to vector<2x32xf32>
    %168 = vector.extract_strided_slice %166 {offsets = [0, 0], sizes = [2, 32], strides = [1, 1]} : vector<2x96xf32> to vector<2x32xf32>
    %169 = arith.addf %167, %168 : vector<2x32xf32>
    %170 = arith.negf %169 : vector<2x32xf32>
    %171 = math.exp %170 : vector<2x32xf32>
    %cst_38 = arith.constant 1.000000e+00 : f32
    %172 = vector.broadcast %cst_38 : f32 to vector<2x32xf32>
    %173 = arith.addf %172, %171 : vector<2x32xf32>
    %174 = arith.divf %172, %173 : vector<2x32xf32>
    %175 = vector.extract_strided_slice %165 {offsets = [0, 32], sizes = [2, 32], strides = [1, 1]} : vector<2x96xf32> to vector<2x32xf32>
    %176 = vector.extract_strided_slice %166 {offsets = [0, 32], sizes = [2, 32], strides = [1, 1]} : vector<2x96xf32> to vector<2x32xf32>
    %177 = arith.addf %175, %176 : vector<2x32xf32>
    %178 = arith.negf %177 : vector<2x32xf32>
    %179 = math.exp %178 : vector<2x32xf32>
    %cst_39 = arith.constant 1.000000e+00 : f32
    %180 = vector.broadcast %cst_39 : f32 to vector<2x32xf32>
    %181 = arith.addf %180, %179 : vector<2x32xf32>
    %182 = arith.divf %180, %181 : vector<2x32xf32>
    %183 = vector.extract_strided_slice %165 {offsets = [0, 64], sizes = [2, 32], strides = [1, 1]} : vector<2x96xf32> to vector<2x32xf32>
    %184 = vector.extract_strided_slice %166 {offsets = [0, 64], sizes = [2, 32], strides = [1, 1]} : vector<2x96xf32> to vector<2x32xf32>
    %185 = vector.broadcast %5 : vector<1x32xf32> to vector<2x32xf32>
    %186 = arith.addf %184, %185 : vector<2x32xf32>
    %187 = arith.mulf %174, %186 : vector<2x32xf32>
    %188 = arith.addf %183, %187 : vector<2x32xf32>
    %189 = math.tanh %188 : vector<2x32xf32>
    %cst_40 = arith.constant 1.000000e+00 : f32
    %190 = vector.broadcast %cst_40 : f32 to vector<2x32xf32>
    %191 = arith.subf %190, %182 : vector<2x32xf32>
    %192 = arith.mulf %191, %189 : vector<2x32xf32>
    %193 = arith.mulf %182, %163 : vector<2x32xf32>
    %194 = arith.addf %192, %193 : vector<2x32xf32>
    %c10 = arith.constant 10 : index
    %c0_41 = arith.constant 0 : index
    %195 = vector.load %arg13[%c10, %c0_41] : memref<16x32xf32, #tpu.memory_space<vmem>>, vector<2x32xf32>
    tpu.vector_store %arg13[%c10, %c0_41], %194 {strides = array<i32>} : memref<16x32xf32, #tpu.memory_space<vmem>>, vector<2x32xf32>,
    %196 = vector.extract_strided_slice %8 {offsets = [12, 0], sizes = [2, 96], strides = [1, 1]} : vector<16x96xf32> to vector<2x96xf32>
    %cst_42 = arith.constant dense<0.000000e+00> : vector<2x96xf32>
    %197 = tpu.matmul %194, %3, %cst_42 {dimension_numbers = #tpu.dot_dimension_numbers<[1], [0], [0], [1], [0, 0, 1, 1], [], []>} : vector<2x32xf32>, vector<32x96xf32>, vector<2x96xf32> -> vector<2x96xf32>
    %198 = vector.extract_strided_slice %196 {offsets = [0, 0], sizes = [2, 32], strides = [1, 1]} : vector<2x96xf32> to vector<2x32xf32>
    %199 = vector.extract_strided_slice %197 {offsets = [0, 0], sizes = [2, 32], strides = [1, 1]} : vector<2x96xf32> to vector<2x32xf32>
    %200 = arith.addf %198, %199 : vector<2x32xf32>
    %201 = arith.negf %200 : vector<2x32xf32>
    %202 = math.exp %201 : vector<2x32xf32>
    %cst_43 = arith.constant 1.000000e+00 : f32
    %203 = vector.broadcast %cst_43 : f32 to vector<2x32xf32>
    %204 = arith.addf %203, %202 : vector<2x32xf32>
    %205 = arith.divf %203, %204 : vector<2x32xf32>
    %206 = vector.extract_strided_slice %196 {offsets = [0, 32], sizes = [2, 32], strides = [1, 1]} : vector<2x96xf32> to vector<2x32xf32>
    %207 = vector.extract_strided_slice %197 {offsets = [0, 32], sizes = [2, 32], strides = [1, 1]} : vector<2x96xf32> to vector<2x32xf32>
    %208 = arith.addf %206, %207 : vector<2x32xf32>
    %209 = arith.negf %208 : vector<2x32xf32>
    %210 = math.exp %209 : vector<2x32xf32>
    %cst_44 = arith.constant 1.000000e+00 : f32
    %211 = vector.broadcast %cst_44 : f32 to vector<2x32xf32>
    %212 = arith.addf %211, %210 : vector<2x32xf32>
    %213 = arith.divf %211, %212 : vector<2x32xf32>
    %214 = vector.extract_strided_slice %196 {offsets = [0, 64], sizes = [2, 32], strides = [1, 1]} : vector<2x96xf32> to vector<2x32xf32>
    %215 = vector.extract_strided_slice %197 {offsets = [0, 64], sizes = [2, 32], strides = [1, 1]} : vector<2x96xf32> to vector<2x32xf32>
    %216 = vector.broadcast %5 : vector<1x32xf32> to vector<2x32xf32>
    %217 = arith.addf %215, %216 : vector<2x32xf32>
    %218 = arith.mulf %205, %217 : vector<2x32xf32>
    %219 = arith.addf %214, %218 : vector<2x32xf32>
    %220 = math.tanh %219 : vector<2x32xf32>
    %cst_45 = arith.constant 1.000000e+00 : f32
    %221 = vector.broadcast %cst_45 : f32 to vector<2x32xf32>
    %222 = arith.subf %221, %213 : vector<2x32xf32>
    %223 = arith.mulf %222, %220 : vector<2x32xf32>
    %224 = arith.mulf %213, %194 : vector<2x32xf32>
    %225 = arith.addf %223, %224 : vector<2x32xf32>
    %c12 = arith.constant 12 : index
    %c0_46 = arith.constant 0 : index
    %226 = vector.load %arg13[%c12, %c0_46] : memref<16x32xf32, #tpu.memory_space<vmem>>, vector<2x32xf32>
    tpu.vector_store %arg13[%c12, %c0_46], %225 {strides = array<i32>} : memref<16x32xf32, #tpu.memory_space<vmem>>, vector<2x32xf32>,
    %227 = vector.extract_strided_slice %8 {offsets = [14, 0], sizes = [2, 96], strides = [1, 1]} : vector<16x96xf32> to vector<2x96xf32>
    %cst_47 = arith.constant dense<0.000000e+00> : vector<2x96xf32>
    %228 = tpu.matmul %225, %3, %cst_47 {dimension_numbers = #tpu.dot_dimension_numbers<[1], [0], [0], [1], [0, 0, 1, 1], [], []>} : vector<2x32xf32>, vector<32x96xf32>, vector<2x96xf32> -> vector<2x96xf32>
    %229 = vector.extract_strided_slice %227 {offsets = [0, 0], sizes = [2, 32], strides = [1, 1]} : vector<2x96xf32> to vector<2x32xf32>
    %230 = vector.extract_strided_slice %228 {offsets = [0, 0], sizes = [2, 32], strides = [1, 1]} : vector<2x96xf32> to vector<2x32xf32>
    %231 = arith.addf %229, %230 : vector<2x32xf32>
    %232 = arith.negf %231 : vector<2x32xf32>
    %233 = math.exp %232 : vector<2x32xf32>
    %cst_48 = arith.constant 1.000000e+00 : f32
    %234 = vector.broadcast %cst_48 : f32 to vector<2x32xf32>
    %235 = arith.addf %234, %233 : vector<2x32xf32>
    %236 = arith.divf %234, %235 : vector<2x32xf32>
    %237 = vector.extract_strided_slice %227 {offsets = [0, 32], sizes = [2, 32], strides = [1, 1]} : vector<2x96xf32> to vector<2x32xf32>
    %238 = vector.extract_strided_slice %228 {offsets = [0, 32], sizes = [2, 32], strides = [1, 1]} : vector<2x96xf32> to vector<2x32xf32>
    %239 = arith.addf %237, %238 : vector<2x32xf32>
    %240 = arith.negf %239 : vector<2x32xf32>
    %241 = math.exp %240 : vector<2x32xf32>
    %cst_49 = arith.constant 1.000000e+00 : f32
    %242 = vector.broadcast %cst_49 : f32 to vector<2x32xf32>
    %243 = arith.addf %242, %241 : vector<2x32xf32>
    %244 = arith.divf %242, %243 : vector<2x32xf32>
    %245 = vector.extract_strided_slice %227 {offsets = [0, 64], sizes = [2, 32], strides = [1, 1]} : vector<2x96xf32> to vector<2x32xf32>
    %246 = vector.extract_strided_slice %228 {offsets = [0, 64], sizes = [2, 32], strides = [1, 1]} : vector<2x96xf32> to vector<2x32xf32>
    %247 = vector.broadcast %5 : vector<1x32xf32> to vector<2x32xf32>
    %248 = arith.addf %246, %247 : vector<2x32xf32>
    %249 = arith.mulf %236, %248 : vector<2x32xf32>
    %250 = arith.addf %245, %249 : vector<2x32xf32>
    %251 = math.tanh %250 : vector<2x32xf32>
    %cst_50 = arith.constant 1.000000e+00 : f32
    %252 = vector.broadcast %cst_50 : f32 to vector<2x32xf32>
    %253 = arith.subf %252, %244 : vector<2x32xf32>
    %254 = arith.mulf %253, %251 : vector<2x32xf32>
    %255 = arith.mulf %244, %225 : vector<2x32xf32>
    %256 = arith.addf %254, %255 : vector<2x32xf32>
    %c14 = arith.constant 14 : index
    %c0_51 = arith.constant 0 : index
    %257 = vector.load %arg13[%c14, %c0_51] : memref<16x32xf32, #tpu.memory_space<vmem>>, vector<2x32xf32>
    tpu.vector_store %arg13[%c14, %c0_51], %256 {strides = array<i32>} : memref<16x32xf32, #tpu.memory_space<vmem>>, vector<2x32xf32>,
    %c0_52 = arith.constant 0 : index
    %c0_53 = arith.constant 0 : index
    %258 = vector.load %arg6[%c0_52, %c0_53] : memref<32x96xf32, #tpu.memory_space<vmem>>, vector<32x96xf32>
    %c0_54 = arith.constant 0 : index
    %c0_55 = arith.constant 0 : index
    %259 = vector.load %arg7[%c0_54, %c0_55] : memref<32x96xf32, #tpu.memory_space<vmem>>, vector<32x96xf32>
    %c0_56 = arith.constant 0 : index
    %c0_57 = arith.constant 0 : index
    %260 = vector.load %arg8[%c0_56, %c0_57] : memref<1x96xf32, #tpu.memory_space<vmem>>, vector<1x96xf32>
    %c0_58 = arith.constant 0 : index
    %c0_59 = arith.constant 0 : index
    %261 = vector.load %arg9[%c0_58, %c0_59] : memref<1x32xf32, #tpu.memory_space<vmem>>, vector<1x32xf32>
    %c0_60 = arith.constant 0 : index
    %c0_61 = arith.constant 0 : index
    %262 = vector.load %arg13[%c0_60, %c0_61] : memref<16x32xf32, #tpu.memory_space<vmem>>, vector<16x32xf32>
    %cst_62 = arith.constant dense<0.000000e+00> : vector<16x96xf32>
    %263 = tpu.matmul %262, %258, %cst_62 {dimension_numbers = #tpu.dot_dimension_numbers<[1], [0], [0], [1], [0, 0, 1, 1], [], []>} : vector<16x32xf32>, vector<32x96xf32>, vector<16x96xf32> -> vector<16x96xf32>
    %264 = vector.broadcast %260 : vector<1x96xf32> to vector<16x96xf32>
    %265 = arith.addf %263, %264 : vector<16x96xf32>
    %cst_63 = arith.constant 0.000000e+00 : f32
    %266 = vector.broadcast %cst_63 : f32 to vector<2x32xf32>
    %267 = vector.extract_strided_slice %265 {offsets = [0, 0], sizes = [2, 96], strides = [1, 1]} : vector<16x96xf32> to vector<2x96xf32>
    %cst_64 = arith.constant dense<0.000000e+00> : vector<2x96xf32>
    %268 = tpu.matmul %266, %259, %cst_64 {dimension_numbers = #tpu.dot_dimension_numbers<[1], [0], [0], [1], [0, 0, 1, 1], [], []>} : vector<2x32xf32>, vector<32x96xf32>, vector<2x96xf32> -> vector<2x96xf32>
    %269 = vector.extract_strided_slice %267 {offsets = [0, 0], sizes = [2, 32], strides = [1, 1]} : vector<2x96xf32> to vector<2x32xf32>
    %270 = vector.extract_strided_slice %268 {offsets = [0, 0], sizes = [2, 32], strides = [1, 1]} : vector<2x96xf32> to vector<2x32xf32>
    %271 = arith.addf %269, %270 : vector<2x32xf32>
    %272 = arith.negf %271 : vector<2x32xf32>
    %273 = math.exp %272 : vector<2x32xf32>
    %cst_65 = arith.constant 1.000000e+00 : f32
    %274 = vector.broadcast %cst_65 : f32 to vector<2x32xf32>
    %275 = arith.addf %274, %273 : vector<2x32xf32>
    %276 = arith.divf %274, %275 : vector<2x32xf32>
    %277 = vector.extract_strided_slice %267 {offsets = [0, 32], sizes = [2, 32], strides = [1, 1]} : vector<2x96xf32> to vector<2x32xf32>
    %278 = vector.extract_strided_slice %268 {offsets = [0, 32], sizes = [2, 32], strides = [1, 1]} : vector<2x96xf32> to vector<2x32xf32>
    %279 = arith.addf %277, %278 : vector<2x32xf32>
    %280 = arith.negf %279 : vector<2x32xf32>
    %281 = math.exp %280 : vector<2x32xf32>
    %cst_66 = arith.constant 1.000000e+00 : f32
    %282 = vector.broadcast %cst_66 : f32 to vector<2x32xf32>
    %283 = arith.addf %282, %281 : vector<2x32xf32>
    %284 = arith.divf %282, %283 : vector<2x32xf32>
    %285 = vector.extract_strided_slice %267 {offsets = [0, 64], sizes = [2, 32], strides = [1, 1]} : vector<2x96xf32> to vector<2x32xf32>
    %286 = vector.extract_strided_slice %268 {offsets = [0, 64], sizes = [2, 32], strides = [1, 1]} : vector<2x96xf32> to vector<2x32xf32>
    %287 = vector.broadcast %261 : vector<1x32xf32> to vector<2x32xf32>
    %288 = arith.addf %286, %287 : vector<2x32xf32>
    %289 = arith.mulf %276, %288 : vector<2x32xf32>
    %290 = arith.addf %285, %289 : vector<2x32xf32>
    %291 = math.tanh %290 : vector<2x32xf32>
    %cst_67 = arith.constant 1.000000e+00 : f32
    %292 = vector.broadcast %cst_67 : f32 to vector<2x32xf32>
    %293 = arith.subf %292, %284 : vector<2x32xf32>
    %294 = arith.mulf %293, %291 : vector<2x32xf32>
    %295 = arith.mulf %284, %266 : vector<2x32xf32>
    %296 = arith.addf %294, %295 : vector<2x32xf32>
    %297 = vector.extract_strided_slice %265 {offsets = [2, 0], sizes = [2, 96], strides = [1, 1]} : vector<16x96xf32> to vector<2x96xf32>
    %cst_68 = arith.constant dense<0.000000e+00> : vector<2x96xf32>
    %298 = tpu.matmul %296, %259, %cst_68 {dimension_numbers = #tpu.dot_dimension_numbers<[1], [0], [0], [1], [0, 0, 1, 1], [], []>} : vector<2x32xf32>, vector<32x96xf32>, vector<2x96xf32> -> vector<2x96xf32>
    %299 = vector.extract_strided_slice %297 {offsets = [0, 0], sizes = [2, 32], strides = [1, 1]} : vector<2x96xf32> to vector<2x32xf32>
    %300 = vector.extract_strided_slice %298 {offsets = [0, 0], sizes = [2, 32], strides = [1, 1]} : vector<2x96xf32> to vector<2x32xf32>
    %301 = arith.addf %299, %300 : vector<2x32xf32>
    %302 = arith.negf %301 : vector<2x32xf32>
    %303 = math.exp %302 : vector<2x32xf32>
    %cst_69 = arith.constant 1.000000e+00 : f32
    %304 = vector.broadcast %cst_69 : f32 to vector<2x32xf32>
    %305 = arith.addf %304, %303 : vector<2x32xf32>
    %306 = arith.divf %304, %305 : vector<2x32xf32>
    %307 = vector.extract_strided_slice %297 {offsets = [0, 32], sizes = [2, 32], strides = [1, 1]} : vector<2x96xf32> to vector<2x32xf32>
    %308 = vector.extract_strided_slice %298 {offsets = [0, 32], sizes = [2, 32], strides = [1, 1]} : vector<2x96xf32> to vector<2x32xf32>
    %309 = arith.addf %307, %308 : vector<2x32xf32>
    %310 = arith.negf %309 : vector<2x32xf32>
    %311 = math.exp %310 : vector<2x32xf32>
    %cst_70 = arith.constant 1.000000e+00 : f32
    %312 = vector.broadcast %cst_70 : f32 to vector<2x32xf32>
    %313 = arith.addf %312, %311 : vector<2x32xf32>
    %314 = arith.divf %312, %313 : vector<2x32xf32>
    %315 = vector.extract_strided_slice %297 {offsets = [0, 64], sizes = [2, 32], strides = [1, 1]} : vector<2x96xf32> to vector<2x32xf32>
    %316 = vector.extract_strided_slice %298 {offsets = [0, 64], sizes = [2, 32], strides = [1, 1]} : vector<2x96xf32> to vector<2x32xf32>
    %317 = vector.broadcast %261 : vector<1x32xf32> to vector<2x32xf32>
    %318 = arith.addf %316, %317 : vector<2x32xf32>
    %319 = arith.mulf %306, %318 : vector<2x32xf32>
    %320 = arith.addf %315, %319 : vector<2x32xf32>
    %321 = math.tanh %320 : vector<2x32xf32>
    %cst_71 = arith.constant 1.000000e+00 : f32
    %322 = vector.broadcast %cst_71 : f32 to vector<2x32xf32>
    %323 = arith.subf %322, %314 : vector<2x32xf32>
    %324 = arith.mulf %323, %321 : vector<2x32xf32>
    %325 = arith.mulf %314, %296 : vector<2x32xf32>
    %326 = arith.addf %324, %325 : vector<2x32xf32>
    %327 = vector.extract_strided_slice %265 {offsets = [4, 0], sizes = [2, 96], strides = [1, 1]} : vector<16x96xf32> to vector<2x96xf32>
    %cst_72 = arith.constant dense<0.000000e+00> : vector<2x96xf32>
    %328 = tpu.matmul %326, %259, %cst_72 {dimension_numbers = #tpu.dot_dimension_numbers<[1], [0], [0], [1], [0, 0, 1, 1], [], []>} : vector<2x32xf32>, vector<32x96xf32>, vector<2x96xf32> -> vector<2x96xf32>
    %329 = vector.extract_strided_slice %327 {offsets = [0, 0], sizes = [2, 32], strides = [1, 1]} : vector<2x96xf32> to vector<2x32xf32>
    %330 = vector.extract_strided_slice %328 {offsets = [0, 0], sizes = [2, 32], strides = [1, 1]} : vector<2x96xf32> to vector<2x32xf32>
    %331 = arith.addf %329, %330 : vector<2x32xf32>
    %332 = arith.negf %331 : vector<2x32xf32>
    %333 = math.exp %332 : vector<2x32xf32>
    %cst_73 = arith.constant 1.000000e+00 : f32
    %334 = vector.broadcast %cst_73 : f32 to vector<2x32xf32>
    %335 = arith.addf %334, %333 : vector<2x32xf32>
    %336 = arith.divf %334, %335 : vector<2x32xf32>
    %337 = vector.extract_strided_slice %327 {offsets = [0, 32], sizes = [2, 32], strides = [1, 1]} : vector<2x96xf32> to vector<2x32xf32>
    %338 = vector.extract_strided_slice %328 {offsets = [0, 32], sizes = [2, 32], strides = [1, 1]} : vector<2x96xf32> to vector<2x32xf32>
    %339 = arith.addf %337, %338 : vector<2x32xf32>
    %340 = arith.negf %339 : vector<2x32xf32>
    %341 = math.exp %340 : vector<2x32xf32>
    %cst_74 = arith.constant 1.000000e+00 : f32
    %342 = vector.broadcast %cst_74 : f32 to vector<2x32xf32>
    %343 = arith.addf %342, %341 : vector<2x32xf32>
    %344 = arith.divf %342, %343 : vector<2x32xf32>
    %345 = vector.extract_strided_slice %327 {offsets = [0, 64], sizes = [2, 32], strides = [1, 1]} : vector<2x96xf32> to vector<2x32xf32>
    %346 = vector.extract_strided_slice %328 {offsets = [0, 64], sizes = [2, 32], strides = [1, 1]} : vector<2x96xf32> to vector<2x32xf32>
    %347 = vector.broadcast %261 : vector<1x32xf32> to vector<2x32xf32>
    %348 = arith.addf %346, %347 : vector<2x32xf32>
    %349 = arith.mulf %336, %348 : vector<2x32xf32>
    %350 = arith.addf %345, %349 : vector<2x32xf32>
    %351 = math.tanh %350 : vector<2x32xf32>
    %cst_75 = arith.constant 1.000000e+00 : f32
    %352 = vector.broadcast %cst_75 : f32 to vector<2x32xf32>
    %353 = arith.subf %352, %344 : vector<2x32xf32>
    %354 = arith.mulf %353, %351 : vector<2x32xf32>
    %355 = arith.mulf %344, %326 : vector<2x32xf32>
    %356 = arith.addf %354, %355 : vector<2x32xf32>
    %357 = vector.extract_strided_slice %265 {offsets = [6, 0], sizes = [2, 96], strides = [1, 1]} : vector<16x96xf32> to vector<2x96xf32>
    %cst_76 = arith.constant dense<0.000000e+00> : vector<2x96xf32>
    %358 = tpu.matmul %356, %259, %cst_76 {dimension_numbers = #tpu.dot_dimension_numbers<[1], [0], [0], [1], [0, 0, 1, 1], [], []>} : vector<2x32xf32>, vector<32x96xf32>, vector<2x96xf32> -> vector<2x96xf32>
    %359 = vector.extract_strided_slice %357 {offsets = [0, 0], sizes = [2, 32], strides = [1, 1]} : vector<2x96xf32> to vector<2x32xf32>
    %360 = vector.extract_strided_slice %358 {offsets = [0, 0], sizes = [2, 32], strides = [1, 1]} : vector<2x96xf32> to vector<2x32xf32>
    %361 = arith.addf %359, %360 : vector<2x32xf32>
    %362 = arith.negf %361 : vector<2x32xf32>
    %363 = math.exp %362 : vector<2x32xf32>
    %cst_77 = arith.constant 1.000000e+00 : f32
    %364 = vector.broadcast %cst_77 : f32 to vector<2x32xf32>
    %365 = arith.addf %364, %363 : vector<2x32xf32>
    %366 = arith.divf %364, %365 : vector<2x32xf32>
    %367 = vector.extract_strided_slice %357 {offsets = [0, 32], sizes = [2, 32], strides = [1, 1]} : vector<2x96xf32> to vector<2x32xf32>
    %368 = vector.extract_strided_slice %358 {offsets = [0, 32], sizes = [2, 32], strides = [1, 1]} : vector<2x96xf32> to vector<2x32xf32>
    %369 = arith.addf %367, %368 : vector<2x32xf32>
    %370 = arith.negf %369 : vector<2x32xf32>
    %371 = math.exp %370 : vector<2x32xf32>
    %cst_78 = arith.constant 1.000000e+00 : f32
    %372 = vector.broadcast %cst_78 : f32 to vector<2x32xf32>
    %373 = arith.addf %372, %371 : vector<2x32xf32>
    %374 = arith.divf %372, %373 : vector<2x32xf32>
    %375 = vector.extract_strided_slice %357 {offsets = [0, 64], sizes = [2, 32], strides = [1, 1]} : vector<2x96xf32> to vector<2x32xf32>
    %376 = vector.extract_strided_slice %358 {offsets = [0, 64], sizes = [2, 32], strides = [1, 1]} : vector<2x96xf32> to vector<2x32xf32>
    %377 = vector.broadcast %261 : vector<1x32xf32> to vector<2x32xf32>
    %378 = arith.addf %376, %377 : vector<2x32xf32>
    %379 = arith.mulf %366, %378 : vector<2x32xf32>
    %380 = arith.addf %375, %379 : vector<2x32xf32>
    %381 = math.tanh %380 : vector<2x32xf32>
    %cst_79 = arith.constant 1.000000e+00 : f32
    %382 = vector.broadcast %cst_79 : f32 to vector<2x32xf32>
    %383 = arith.subf %382, %374 : vector<2x32xf32>
    %384 = arith.mulf %383, %381 : vector<2x32xf32>
    %385 = arith.mulf %374, %356 : vector<2x32xf32>
    %386 = arith.addf %384, %385 : vector<2x32xf32>
    %387 = vector.extract_strided_slice %265 {offsets = [8, 0], sizes = [2, 96], strides = [1, 1]} : vector<16x96xf32> to vector<2x96xf32>
    %cst_80 = arith.constant dense<0.000000e+00> : vector<2x96xf32>
    %388 = tpu.matmul %386, %259, %cst_80 {dimension_numbers = #tpu.dot_dimension_numbers<[1], [0], [0], [1], [0, 0, 1, 1], [], []>} : vector<2x32xf32>, vector<32x96xf32>, vector<2x96xf32> -> vector<2x96xf32>
    %389 = vector.extract_strided_slice %387 {offsets = [0, 0], sizes = [2, 32], strides = [1, 1]} : vector<2x96xf32> to vector<2x32xf32>
    %390 = vector.extract_strided_slice %388 {offsets = [0, 0], sizes = [2, 32], strides = [1, 1]} : vector<2x96xf32> to vector<2x32xf32>
    %391 = arith.addf %389, %390 : vector<2x32xf32>
    %392 = arith.negf %391 : vector<2x32xf32>
    %393 = math.exp %392 : vector<2x32xf32>
    %cst_81 = arith.constant 1.000000e+00 : f32
    %394 = vector.broadcast %cst_81 : f32 to vector<2x32xf32>
    %395 = arith.addf %394, %393 : vector<2x32xf32>
    %396 = arith.divf %394, %395 : vector<2x32xf32>
    %397 = vector.extract_strided_slice %387 {offsets = [0, 32], sizes = [2, 32], strides = [1, 1]} : vector<2x96xf32> to vector<2x32xf32>
    %398 = vector.extract_strided_slice %388 {offsets = [0, 32], sizes = [2, 32], strides = [1, 1]} : vector<2x96xf32> to vector<2x32xf32>
    %399 = arith.addf %397, %398 : vector<2x32xf32>
    %400 = arith.negf %399 : vector<2x32xf32>
    %401 = math.exp %400 : vector<2x32xf32>
    %cst_82 = arith.constant 1.000000e+00 : f32
    %402 = vector.broadcast %cst_82 : f32 to vector<2x32xf32>
    %403 = arith.addf %402, %401 : vector<2x32xf32>
    %404 = arith.divf %402, %403 : vector<2x32xf32>
    %405 = vector.extract_strided_slice %387 {offsets = [0, 64], sizes = [2, 32], strides = [1, 1]} : vector<2x96xf32> to vector<2x32xf32>
    %406 = vector.extract_strided_slice %388 {offsets = [0, 64], sizes = [2, 32], strides = [1, 1]} : vector<2x96xf32> to vector<2x32xf32>
    %407 = vector.broadcast %261 : vector<1x32xf32> to vector<2x32xf32>
    %408 = arith.addf %406, %407 : vector<2x32xf32>
    %409 = arith.mulf %396, %408 : vector<2x32xf32>
    %410 = arith.addf %405, %409 : vector<2x32xf32>
    %411 = math.tanh %410 : vector<2x32xf32>
    %cst_83 = arith.constant 1.000000e+00 : f32
    %412 = vector.broadcast %cst_83 : f32 to vector<2x32xf32>
    %413 = arith.subf %412, %404 : vector<2x32xf32>
    %414 = arith.mulf %413, %411 : vector<2x32xf32>
    %415 = arith.mulf %404, %386 : vector<2x32xf32>
    %416 = arith.addf %414, %415 : vector<2x32xf32>
    %417 = vector.extract_strided_slice %265 {offsets = [10, 0], sizes = [2, 96], strides = [1, 1]} : vector<16x96xf32> to vector<2x96xf32>
    %cst_84 = arith.constant dense<0.000000e+00> : vector<2x96xf32>
    %418 = tpu.matmul %416, %259, %cst_84 {dimension_numbers = #tpu.dot_dimension_numbers<[1], [0], [0], [1], [0, 0, 1, 1], [], []>} : vector<2x32xf32>, vector<32x96xf32>, vector<2x96xf32> -> vector<2x96xf32>
    %419 = vector.extract_strided_slice %417 {offsets = [0, 0], sizes = [2, 32], strides = [1, 1]} : vector<2x96xf32> to vector<2x32xf32>
    %420 = vector.extract_strided_slice %418 {offsets = [0, 0], sizes = [2, 32], strides = [1, 1]} : vector<2x96xf32> to vector<2x32xf32>
    %421 = arith.addf %419, %420 : vector<2x32xf32>
    %422 = arith.negf %421 : vector<2x32xf32>
    %423 = math.exp %422 : vector<2x32xf32>
    %cst_85 = arith.constant 1.000000e+00 : f32
    %424 = vector.broadcast %cst_85 : f32 to vector<2x32xf32>
    %425 = arith.addf %424, %423 : vector<2x32xf32>
    %426 = arith.divf %424, %425 : vector<2x32xf32>
    %427 = vector.extract_strided_slice %417 {offsets = [0, 32], sizes = [2, 32], strides = [1, 1]} : vector<2x96xf32> to vector<2x32xf32>
    %428 = vector.extract_strided_slice %418 {offsets = [0, 32], sizes = [2, 32], strides = [1, 1]} : vector<2x96xf32> to vector<2x32xf32>
    %429 = arith.addf %427, %428 : vector<2x32xf32>
    %430 = arith.negf %429 : vector<2x32xf32>
    %431 = math.exp %430 : vector<2x32xf32>
    %cst_86 = arith.constant 1.000000e+00 : f32
    %432 = vector.broadcast %cst_86 : f32 to vector<2x32xf32>
    %433 = arith.addf %432, %431 : vector<2x32xf32>
    %434 = arith.divf %432, %433 : vector<2x32xf32>
    %435 = vector.extract_strided_slice %417 {offsets = [0, 64], sizes = [2, 32], strides = [1, 1]} : vector<2x96xf32> to vector<2x32xf32>
    %436 = vector.extract_strided_slice %418 {offsets = [0, 64], sizes = [2, 32], strides = [1, 1]} : vector<2x96xf32> to vector<2x32xf32>
    %437 = vector.broadcast %261 : vector<1x32xf32> to vector<2x32xf32>
    %438 = arith.addf %436, %437 : vector<2x32xf32>
    %439 = arith.mulf %426, %438 : vector<2x32xf32>
    %440 = arith.addf %435, %439 : vector<2x32xf32>
    %441 = math.tanh %440 : vector<2x32xf32>
    %cst_87 = arith.constant 1.000000e+00 : f32
    %442 = vector.broadcast %cst_87 : f32 to vector<2x32xf32>
    %443 = arith.subf %442, %434 : vector<2x32xf32>
    %444 = arith.mulf %443, %441 : vector<2x32xf32>
    %445 = arith.mulf %434, %416 : vector<2x32xf32>
    %446 = arith.addf %444, %445 : vector<2x32xf32>
    %447 = vector.extract_strided_slice %265 {offsets = [12, 0], sizes = [2, 96], strides = [1, 1]} : vector<16x96xf32> to vector<2x96xf32>
    %cst_88 = arith.constant dense<0.000000e+00> : vector<2x96xf32>
    %448 = tpu.matmul %446, %259, %cst_88 {dimension_numbers = #tpu.dot_dimension_numbers<[1], [0], [0], [1], [0, 0, 1, 1], [], []>} : vector<2x32xf32>, vector<32x96xf32>, vector<2x96xf32> -> vector<2x96xf32>
    %449 = vector.extract_strided_slice %447 {offsets = [0, 0], sizes = [2, 32], strides = [1, 1]} : vector<2x96xf32> to vector<2x32xf32>
    %450 = vector.extract_strided_slice %448 {offsets = [0, 0], sizes = [2, 32], strides = [1, 1]} : vector<2x96xf32> to vector<2x32xf32>
    %451 = arith.addf %449, %450 : vector<2x32xf32>
    %452 = arith.negf %451 : vector<2x32xf32>
    %453 = math.exp %452 : vector<2x32xf32>
    %cst_89 = arith.constant 1.000000e+00 : f32
    %454 = vector.broadcast %cst_89 : f32 to vector<2x32xf32>
    %455 = arith.addf %454, %453 : vector<2x32xf32>
    %456 = arith.divf %454, %455 : vector<2x32xf32>
    %457 = vector.extract_strided_slice %447 {offsets = [0, 32], sizes = [2, 32], strides = [1, 1]} : vector<2x96xf32> to vector<2x32xf32>
    %458 = vector.extract_strided_slice %448 {offsets = [0, 32], sizes = [2, 32], strides = [1, 1]} : vector<2x96xf32> to vector<2x32xf32>
    %459 = arith.addf %457, %458 : vector<2x32xf32>
    %460 = arith.negf %459 : vector<2x32xf32>
    %461 = math.exp %460 : vector<2x32xf32>
    %cst_90 = arith.constant 1.000000e+00 : f32
    %462 = vector.broadcast %cst_90 : f32 to vector<2x32xf32>
    %463 = arith.addf %462, %461 : vector<2x32xf32>
    %464 = arith.divf %462, %463 : vector<2x32xf32>
    %465 = vector.extract_strided_slice %447 {offsets = [0, 64], sizes = [2, 32], strides = [1, 1]} : vector<2x96xf32> to vector<2x32xf32>
    %466 = vector.extract_strided_slice %448 {offsets = [0, 64], sizes = [2, 32], strides = [1, 1]} : vector<2x96xf32> to vector<2x32xf32>
    %467 = vector.broadcast %261 : vector<1x32xf32> to vector<2x32xf32>
    %468 = arith.addf %466, %467 : vector<2x32xf32>
    %469 = arith.mulf %456, %468 : vector<2x32xf32>
    %470 = arith.addf %465, %469 : vector<2x32xf32>
    %471 = math.tanh %470 : vector<2x32xf32>
    %cst_91 = arith.constant 1.000000e+00 : f32
    %472 = vector.broadcast %cst_91 : f32 to vector<2x32xf32>
    %473 = arith.subf %472, %464 : vector<2x32xf32>
    %474 = arith.mulf %473, %471 : vector<2x32xf32>
    %475 = arith.mulf %464, %446 : vector<2x32xf32>
    %476 = arith.addf %474, %475 : vector<2x32xf32>
    %477 = vector.extract_strided_slice %265 {offsets = [14, 0], sizes = [2, 96], strides = [1, 1]} : vector<16x96xf32> to vector<2x96xf32>
    %cst_92 = arith.constant dense<0.000000e+00> : vector<2x96xf32>
    %478 = tpu.matmul %476, %259, %cst_92 {dimension_numbers = #tpu.dot_dimension_numbers<[1], [0], [0], [1], [0, 0, 1, 1], [], []>} : vector<2x32xf32>, vector<32x96xf32>, vector<2x96xf32> -> vector<2x96xf32>
    %479 = vector.extract_strided_slice %477 {offsets = [0, 0], sizes = [2, 32], strides = [1, 1]} : vector<2x96xf32> to vector<2x32xf32>
    %480 = vector.extract_strided_slice %478 {offsets = [0, 0], sizes = [2, 32], strides = [1, 1]} : vector<2x96xf32> to vector<2x32xf32>
    %481 = arith.addf %479, %480 : vector<2x32xf32>
    %482 = arith.negf %481 : vector<2x32xf32>
    %483 = math.exp %482 : vector<2x32xf32>
    %cst_93 = arith.constant 1.000000e+00 : f32
    %484 = vector.broadcast %cst_93 : f32 to vector<2x32xf32>
    %485 = arith.addf %484, %483 : vector<2x32xf32>
    %486 = arith.divf %484, %485 : vector<2x32xf32>
    %487 = vector.extract_strided_slice %477 {offsets = [0, 32], sizes = [2, 32], strides = [1, 1]} : vector<2x96xf32> to vector<2x32xf32>
    %488 = vector.extract_strided_slice %478 {offsets = [0, 32], sizes = [2, 32], strides = [1, 1]} : vector<2x96xf32> to vector<2x32xf32>
    %489 = arith.addf %487, %488 : vector<2x32xf32>
    %490 = arith.negf %489 : vector<2x32xf32>
    %491 = math.exp %490 : vector<2x32xf32>
    %cst_94 = arith.constant 1.000000e+00 : f32
    %492 = vector.broadcast %cst_94 : f32 to vector<2x32xf32>
    %493 = arith.addf %492, %491 : vector<2x32xf32>
    %494 = arith.divf %492, %493 : vector<2x32xf32>
    %495 = vector.extract_strided_slice %477 {offsets = [0, 64], sizes = [2, 32], strides = [1, 1]} : vector<2x96xf32> to vector<2x32xf32>
    %496 = vector.extract_strided_slice %478 {offsets = [0, 64], sizes = [2, 32], strides = [1, 1]} : vector<2x96xf32> to vector<2x32xf32>
    %497 = vector.broadcast %261 : vector<1x32xf32> to vector<2x32xf32>
    %498 = arith.addf %496, %497 : vector<2x32xf32>
    %499 = arith.mulf %486, %498 : vector<2x32xf32>
    %500 = arith.addf %495, %499 : vector<2x32xf32>
    %501 = math.tanh %500 : vector<2x32xf32>
    %cst_95 = arith.constant 1.000000e+00 : f32
    %502 = vector.broadcast %cst_95 : f32 to vector<2x32xf32>
    %503 = arith.subf %502, %494 : vector<2x32xf32>
    %504 = arith.mulf %503, %501 : vector<2x32xf32>
    %505 = arith.mulf %494, %476 : vector<2x32xf32>
    %506 = arith.addf %504, %505 : vector<2x32xf32>
    %c0_96 = arith.constant 0 : index
    %c0_97 = arith.constant 0 : index
    %507 = vector.load %arg10[%c0_96, %c0_97] : memref<32x1xf32, #tpu.memory_space<vmem>>, vector<32x1xf32>
    %cst_98 = arith.constant dense<0.000000e+00> : vector<2x1xf32>
    %508 = tpu.matmul %506, %507, %cst_98 {dimension_numbers = #tpu.dot_dimension_numbers<[1], [0], [0], [1], [0, 0, 1, 1], [], []>} : vector<2x32xf32>, vector<32x1xf32>, vector<2x1xf32> -> vector<2x1xf32>
    %c0_99 = arith.constant 0 : index
    %c0_100 = arith.constant 0 : index
    %509 = vector.load %arg11[%c0_99, %c0_100] : memref<1x1xf32, #tpu.memory_space<vmem>>, vector<1x1xf32>
    %510 = vector.broadcast %509 : vector<1x1xf32> to vector<2x1xf32>
    %511 = arith.addf %508, %510 : vector<2x1xf32>
    %c0_101 = arith.constant 0 : index
    %c0_102 = arith.constant 0 : index
    %512 = vector.load %arg12[%c0_101, %c0_102] : memref<2x1xf32, #tpu.memory_space<vmem>>, vector<2x1xf32>
    tpu.vector_store %arg12[%c0_101, %c0_102], %511 {strides = array<i32>} : memref<2x1xf32, #tpu.memory_space<vmem>>, vector<2x1xf32>,
    return
  }
  func.func @transform_0(%arg0: i32) -> (i32, i32, i32) {
    %c0_i32 = arith.constant 0 : i32
    %c0_i32_0 = arith.constant 0 : i32
    %c0_i32_1 = arith.constant 0 : i32
    return %arg0, %c0_i32, %c0_i32_0 : i32, i32, i32
  }
  func.func @transform_1(%arg0: i32) -> (i32, i32) {
    %c0_i32 = arith.constant 0 : i32
    %c0_i32_0 = arith.constant 0 : i32
    %c0_i32_1 = arith.constant 0 : i32
    return %c0_i32, %c0_i32_0 : i32, i32
  }
  func.func @transform_2(%arg0: i32) -> (i32, i32) {
    %c0_i32 = arith.constant 0 : i32
    %c0_i32_0 = arith.constant 0 : i32
    %c0_i32_1 = arith.constant 0 : i32
    return %c0_i32, %c0_i32_0 : i32, i32
  }
  func.func @transform_3(%arg0: i32) -> (i32, i32) {
    %c0_i32 = arith.constant 0 : i32
    %c0_i32_0 = arith.constant 0 : i32
    %c0_i32_1 = arith.constant 0 : i32
    return %c0_i32, %c0_i32_0 : i32, i32
  }
  func.func @transform_4(%arg0: i32) -> (i32, i32) {
    %c0_i32 = arith.constant 0 : i32
    %c0_i32_0 = arith.constant 0 : i32
    %c0_i32_1 = arith.constant 0 : i32
    return %c0_i32, %c0_i32_0 : i32, i32
  }
  func.func @transform_5(%arg0: i32) -> (i32, i32) {
    %c0_i32 = arith.constant 0 : i32
    %c0_i32_0 = arith.constant 0 : i32
    %c0_i32_1 = arith.constant 0 : i32
    return %c0_i32, %c0_i32_0 : i32, i32
  }
  func.func @transform_6(%arg0: i32) -> (i32, i32) {
    %c0_i32 = arith.constant 0 : i32
    %c0_i32_0 = arith.constant 0 : i32
    %c0_i32_1 = arith.constant 0 : i32
    return %c0_i32, %c0_i32_0 : i32, i32
  }
  func.func @transform_7(%arg0: i32) -> (i32, i32) {
    %c0_i32 = arith.constant 0 : i32
    %c0_i32_0 = arith.constant 0 : i32
    %c0_i32_1 = arith.constant 0 : i32
    return %c0_i32, %c0_i32_0 : i32, i32
  }
  func.func @transform_8(%arg0: i32) -> (i32, i32) {
    %c0_i32 = arith.constant 0 : i32
    %c0_i32_0 = arith.constant 0 : i32
    %c0_i32_1 = arith.constant 0 : i32
    return %c0_i32, %c0_i32_0 : i32, i32
  }
  func.func @transform_9(%arg0: i32) -> (i32, i32) {
    %c0_i32 = arith.constant 0 : i32
    %c0_i32_0 = arith.constant 0 : i32
    %c0_i32_1 = arith.constant 0 : i32
    return %c0_i32, %c0_i32_0 : i32, i32
  }
  func.func @transform_10(%arg0: i32) -> (i32, i32) {
    %c0_i32 = arith.constant 0 : i32
    %c0_i32_0 = arith.constant 0 : i32
    %c0_i32_1 = arith.constant 0 : i32
    return %c0_i32, %c0_i32_0 : i32, i32
  }
  func.func @transform_11(%arg0: i32) -> (i32, i32) {
    %c0_i32 = arith.constant 0 : i32
    %c0_i32_0 = arith.constant 0 : i32
    return %arg0, %c0_i32 : i32, i32
  }
}

</mosaic_0001>

<llo_original>
// kernel: gru_fc_forward.1
$region0: #{gru_fc_forward.1}
  #allocation0 [shape = 'u32[]', space=smem, size = 0x4, offset = 0x4, fixed_abs, tag = 'smem constant byte address 0x4 - core index']
  #allocation1 [shape = 'u32[144,128]{1,0:T(1,128)}', space=vmem, size = 0x12000, scoped, tag = 'internal scratch']
  #allocation2 [shape = 'f32[16,32]{1,0:T(8,128)}', space=vmem, size = 0x2000, scoped, tag = 'scratch operand']
  #allocation3 [shape = 'f32[1,1]{1,0:T(1,128)S(1)}', space=vmem, size = 0x200, scoped, tag = 'scoped memory for gru_fc_forward.1']
  %s0 = inlined_call_operand.vmem [shape: f32[1,16,8], index: 0, kind: input, shape index: {}]
  %s1 = inlined_call_operand.hbm [shape: f32[8,96], index: 1, kind: input, shape index: {}]
  %s2 = inlined_call_operand.vmem [shape: f32[32,96], index: 2, kind: input, shape index: {}]
  %s3 = inlined_call_operand.vmem [shape: f32[1,96], index: 3, kind: input, shape index: {}]
  %s4 = inlined_call_operand.vmem [shape: f32[1,32], index: 4, kind: input, shape index: {}]
  %s5 = inlined_call_operand.vmem [shape: f32[32,96], index: 5, kind: input, shape index: {}]
  %s6 = inlined_call_operand.vmem [shape: f32[32,96], index: 6, kind: input, shape index: {}]
  %s7 = inlined_call_operand.vmem [shape: f32[1,96], index: 7, kind: input, shape index: {}]
  %s8 = inlined_call_operand.vmem [shape: f32[1,32], index: 8, kind: input, shape index: {}]
  %s9 = inlined_call_operand.vmem [shape: f32[32,1], index: 9, kind: input, shape index: {}]
  %s10 = inlined_call_operand.<no memory space> [shape: f32[1,1], index: 10, kind: input, shape index: {}]
  %s11 = inlined_call_operand.vmem [shape: f32[2,1], index: 11, kind: output, shape index: {}]
  %s12 = sld [smem:[#allocation0]]
  $region58: #{gru_fc_forward.1} parent=0
    _
  %s14 = ssub.s32 1, %s12
  %s15 = scalar_select 0, %s14, %s12
  %v16 = vstv %s10
  %17 = vst [vmem:[#allocation3] sm:$0x1] %v16
  $region1: #{gru_fc_forward.1} parent=0
    #allocation4 [shape = 'u8[4096]{0}', space=vmem, size = 0x1000, scoped, tag = 'input window, operand 1, single buffered']
    #allocation5 [shape = 's32[1]{0}', space=sflag, size = 0x4, scoped, tag = 'scoped memory for gru_fc_forward.1']
    %18 = vsyncpa [#allocation5], 0
    // Predicated region
    $region2: #{gru_fc_forward.1} parent=1 // pred_check
      _
    $region3: #{gru_fc_forward.1} parent=1 // pred_check_branch
      %20 = sbr.rel (0) target = $region5
    $region4: #{gru_fc_forward.1} parent=1 // pred_region
      _
    $region5: #{gru_fc_forward.1} parent=1 // pred_fallthru
      _
    // Predicated region
    $region6: #{gru_fc_forward.1} parent=1 // pred_check
      _
    $region7: #{gru_fc_forward.1} parent=1 // pred_check_branch
      %22 = sbr.rel (0) target = $region9
    $region8: #{gru_fc_forward.1} parent=1 // pred_region
      %s24 = ssub.s32 128, 128
      %25 = vsyncadd [#allocation5], %s24
      %s27 = sshll.u32 [#allocation4], 4
      %s28 = int_to_ptr.vmem [resolvable:$true] %s27
      %30 = dma.hbm_to_vmem [thread:$0]  %s1, 128, %s28, [#allocation5]
    $region9: #{gru_fc_forward.1} parent=1 // pred_fallthru
      _
    // Predicated region
    $region10: #{gru_fc_forward.1} parent=1 // pred_check
      _
    $region11: #{gru_fc_forward.1} parent=1 // pred_check_branch
      %32 = sbr.rel (0) target = $region13
    $region12: #{gru_fc_forward.1} parent=1 // pred_region
      _
    $region13: #{gru_fc_forward.1} parent=1 // pred_fallthru
      _
    // Predicated region
    $region14: #{gru_fc_forward.1} parent=1 // pred_check
      _
    $region15: #{gru_fc_forward.1} parent=1 // pred_check_branch
      %34 = sbr.rel (0) target = $region17
    $region16: #{gru_fc_forward.1} parent=1 // pred_region
      _
    $region17: #{gru_fc_forward.1} parent=1 // pred_fallthru
      _
    // Predicated region
    $region18: #{gru_fc_forward.1} parent=1 // pred_check
      _
    $region19: #{gru_fc_forward.1} parent=1 // pred_check_branch
      %36 = sbr.rel (0) target = $region21
    $region20: #{gru_fc_forward.1} parent=1 // pred_region
      _
    $region21: #{gru_fc_forward.1} parent=1 // pred_fallthru
      _
    // Predicated region
    $region22: #{gru_fc_forward.1} parent=1 // pred_check
      _
    $region23: #{gru_fc_forward.1} parent=1 // pred_check_branch
      %38 = sbr.rel (0) target = $region25
    $region24: #{gru_fc_forward.1} parent=1 // pred_region
      _
    $region25: #{gru_fc_forward.1} parent=1 // pred_fallthru
      _
    // Predicated region
    $region26: #{gru_fc_forward.1} parent=1 // pred_check
      _
    $region27: #{gru_fc_forward.1} parent=1 // pred_check_branch
      %40 = sbr.rel (0) target = $region29
    $region28: #{gru_fc_forward.1} parent=1 // pred_region
      _
    $region29: #{gru_fc_forward.1} parent=1 // pred_fallthru
      _
    // Predicated region
    $region30: #{gru_fc_forward.1} parent=1 // pred_check
      _
    $region31: #{gru_fc_forward.1} parent=1 // pred_check_branch
      %42 = sbr.rel (0) target = $region33
    $region32: #{gru_fc_forward.1} parent=1 // pred_region
      _
    $region33: #{gru_fc_forward.1} parent=1 // pred_fallthru
      _
    // Predicated region
    $region34: #{gru_fc_forward.1} parent=1 // pred_check
      _
    $region35: #{gru_fc_forward.1} parent=1 // pred_check_branch
      %44 = sbr.rel (0) target = $region37
    $region36: #{gru_fc_forward.1} parent=1 // pred_region
      _
    $region37: #{gru_fc_forward.1} parent=1 // pred_fallthru
      _
    // Predicated region
    $region38: #{gru_fc_forward.1} parent=1 // pred_check
      _
    $region39: #{gru_fc_forward.1} parent=1 // pred_check_branch
      %46 = sbr.rel (0) target = $region41
    $region40: #{gru_fc_forward.1} parent=1 // pred_region
      _
    $region41: #{gru_fc_forward.1} parent=1 // pred_fallthru
      _
    // Predicated region
    $region42: #{gru_fc_forward.1} parent=1 // pred_check
      _
    $region43: #{gru_fc_forward.1} parent=1 // pred_check_branch
      %48 = sbr.rel (0) target = $region45
    $region44: #{gru_fc_forward.1} parent=1 // pred_region
      _
    $region45: #{gru_fc_forward.1} parent=1 // pred_fallthru
      _
    // Predicated region
    $region46: #{gru_fc_forward.1} parent=1 // pred_check
      _
    $region47: #{gru_fc_forward.1} parent=1 // pred_check_branch
      %50 = sbr.rel (0) target = $region49
    $region48: #{gru_fc_forward.1} parent=1 // pred_region
      %51 = dma.done [#allocation5], 128
    $region49: #{gru_fc_forward.1} parent=1 // pred_fallthru
      _
    %v52 = vld [vmem:[%s0] sm:$0xff]
    %v53 = vld [vmem:[%s0 + $0x8] sm:$0xff]
    %v54 = vld [vmem:[#allocation4] sm:$0xff]
    %v55 = vld [vmem:[%s2] sm:$0xff]
    %v56 = vld [vmem:[%s2 + $0x8] sm:$0xff]
    %v57 = vld [vmem:[%s2 + $0x10] sm:$0xff]
    %v58 = vld [vmem:[%s2 + $0x18] sm:$0xff]
    %v59 = vld [vmem:[%s3] sm:$0x1]
    %v60 = vld [vmem:[%s4] sm:$0x1]
    %v62 = vlaneseq
    %v63 = vshrl.u32 %v62, 7
    %v64 = vsub.s32 0, %v63
    %v65 = vrot.slane %v59, %v64
    %vm67 = vcmask 64512
    %v69 = vsel %vm67, %v52, 0
    %v72 = vsel %vm67, %v53, 0
    %74 = vmatprep.subr.mxu0 0.0
    %75 = vmatpush1.msra.mxu0 %v54
    %76 = vmatprep.subr.mxu0 0.0
    %77 = vmatpush1.msra.mxu0 0.0
    %78 = vmatprep.subr.mxu0 0.0
    %79 = vmatpush1.msra.mxu0 0.0
    %80 = vmatprep.subr.mxu0 0.0
    %81 = vmatpush1.msra.mxu0 0.0
    %82 = vmatprep.subr.mxu0 0.0
    %83 = vmatpush1.msra.mxu0 0.0
    %84 = vmatprep.subr.mxu0 0.0
    %85 = vmatpush1.msra.mxu0 0.0
    %86 = vmatprep.subr.mxu0 0.0
    %87 = vmatpush1.msra.mxu0 0.0
    %88 = vmatprep.subr.mxu0 0.0
    %89 = vmatpush1.msra.mxu0 0.0
    %90 = vmatprep.subr.mxu0 0.0
    %91 = vmatpush1.msra.mxu0 0.0
    %92 = vmatprep.subr.mxu0 0.0
    %93 = vmatpush1.msra.mxu0 0.0
    %94 = vmatprep.subr.mxu0 0.0
    %95 = vmatpush1.msra.mxu0 0.0
    %96 = vmatprep.subr.mxu0 0.0
    %97 = vmatpush1.msra.mxu0 0.0
    %98 = vmatprep.subr.mxu0 0.0
    %99 = vmatpush1.msra.mxu0 0.0
    %100 = vmatprep.subr.mxu0 0.0
    %101 = vmatpush1.msra.mxu0 0.0
    %102 = vmatprep.subr.mxu0 0.0
    %103 = vmatpush1.msra.mxu0 0.0
    %104 = vmatprep.subr.mxu0 0.0
    %105 = vmatpush1.msra.mxu0 0.0
    %106 = vmatprep.subr.mxu0 0.0
    %107 = vmatpush1.msra.mxu0 0.0
    %108 = vmatprep.subr.mxu0 0.0
    %109 = vmatpush1.msra.mxu0 0.0
    %110 = vmatprep.subr.mxu0 0.0
    %111 = vmatpush1.msra.mxu0 0.0
    %112 = vmatprep.subr.mxu0 0.0
    %113 = vmatpush1.msra.mxu0 0.0
    %114 = vmatprep.subr.mxu0 0.0
    %115 = vmatpush1.msra.mxu0 0.0
    %116 = vmatprep.subr.mxu0 0.0
    %117 = vmatpush1.msra.mxu0 0.0
    %118 = vmatprep.subr.mxu0 0.0
    %119 = vmatpush1.msra.mxu0 0.0
    %120 = vmatprep.subr.mxu0 0.0
    %121 = vmatpush1.msra.mxu0 0.0
    %122 = vmatprep.subr.mxu0 0.0
    %123 = vmatpush1.msra.mxu0 0.0
    %124 = vmatprep.subr.mxu0 0.0
    %125 = vmatpush1.msra.mxu0 0.0
    %126 = vmatprep.subr.mxu0 0.0
    %127 = vmatpush1.msra.mxu0 0.0
    %128 = vmatprep.subr.mxu0 0.0
    %129 = vmatpush1.msra.mxu0 0.0
    %130 = vmatprep.subr.mxu0 0.0
    %131 = vmatpush1.msra.mxu0 0.0
    %132 = vmatprep.subr.mxu0 0.0
    %133 = vmatpush1.msra.mxu0 0.0
    %134 = vmatprep.subr.mxu0 0.0
    %135 = vmatpush1.msra.mxu0 0.0
    %136 = vmatprep.subr.mxu0 0.0
    %137 = vmatpush1.msra.mxu0 0.0
    %138 = vmatprep.mubr.f32.mxu0 0.0
    %139 = vmatmul.mubr.f32.gmra.mrb[0].mxu0 %v69
    %v140 = vpop.f32.mrb[0].mxu0
    %v141 = vadd.f32 %v65, %v140
    %v142 = vpop.f32.mrb[0].mxu0
    %143 = vmatprep.mubr.f32.mxu0 0.0
    %144 = vmatmul.mubr.f32.gmra.mrb[0].mxu0 %v72
    %v145 = vpop.f32.mrb[0].mxu0
    %v146 = vadd.f32 %v65, %v145
    %v147 = vpop.f32.mrb[0].mxu0
    %148 = vdwg.mxu0
    %vm149 = vcmask 261120
    %v151 = vsel %vm149, 0.0, 0
    %153 = vmatprep.subr.mxu0 0.0
    %154 = vmatpush1.msra.mxu0 %v55
    %155 = vmatprep.subr.mxu0 0.0
    %156 = vmatpush1.msra.mxu0 %v56
    %157 = vmatprep.subr.mxu0 0.0
    %158 = vmatpush1.msra.mxu0 %v57
    %159 = vmatprep.subr.mxu0 0.0
    %160 = vmatpush1.msra.mxu0 %v58
    %161 = vmatprep.subr.mxu0 0.0
    %162 = vmatpush1.msra.mxu0 0.0
    %163 = vmatprep.subr.mxu0 0.0
    %164 = vmatpush1.msra.mxu0 0.0
    %165 = vmatprep.subr.mxu0 0.0
    %166 = vmatpush1.msra.mxu0 0.0
    %167 = vmatprep.subr.mxu0 0.0
    %168 = vmatpush1.msra.mxu0 0.0
    %169 = vmatprep.subr.mxu0 0.0
    %170 = vmatpush1.msra.mxu0 0.0
    %171 = vmatprep.subr.mxu0 0.0
    %172 = vmatpush1.msra.mxu0 0.0
    %173 = vmatprep.subr.mxu0 0.0
    %174 = vmatpush1.msra.mxu0 0.0
    %175 = vmatprep.subr.mxu0 0.0
    %176 = vmatpush1.msra.mxu0 0.0
    %177 = vmatprep.subr.mxu0 0.0
    %178 = vmatpush1.msra.mxu0 0.0
    %179 = vmatprep.subr.mxu0 0.0
    %180 = vmatpush1.msra.mxu0 0.0
    %181 = vmatprep.subr.mxu0 0.0
    %182 = vmatpush1.msra.mxu0 0.0
    %183 = vmatprep.subr.mxu0 0.0
    %184 = vmatpush1.msra.mxu0 0.0
    %185 = vmatprep.subr.mxu0 0.0
    %186 = vmatpush1.msra.mxu0 0.0
    %187 = vmatprep.subr.mxu0 0.0
    %188 = vmatpush1.msra.mxu0 0.0
    %189 = vmatprep.subr.mxu0 0.0
    %190 = vmatpush1.msra.mxu0 0.0
    %191 = vmatprep.subr.mxu0 0.0
    %192 = vmatpush1.msra.mxu0 0.0
    %193 = vmatprep.subr.mxu0 0.0
    %194 = vmatpush1.msra.mxu0 0.0
    %195 = vmatprep.subr.mxu0 0.0
    %196 = vmatpush1.msra.mxu0 0.0
    %197 = vmatprep.subr.mxu0 0.0
    %198 = vmatpush1.msra.mxu0 0.0
    %199 = vmatprep.subr.mxu0 0.0
    %200 = vmatpush1.msra.mxu0 0.0
    %201 = vmatprep.subr.mxu0 0.0
    %202 = vmatpush1.msra.mxu0 0.0
    %203 = vmatprep.subr.mxu0 0.0
    %204 = vmatpush1.msra.mxu0 0.0
    %205 = vmatprep.subr.mxu0 0.0
    %206 = vmatpush1.msra.mxu0 0.0
    %207 = vmatprep.subr.mxu0 0.0
    %208 = vmatpush1.msra.mxu0 0.0
    %209 = vmatprep.subr.mxu0 0.0
    %210 = vmatpush1.msra.mxu0 0.0
    %211 = vmatprep.subr.mxu0 0.0
    %212 = vmatpush1.msra.mxu0 0.0
    %213 = vmatprep.subr.mxu0 0.0
    %214 = vmatpush1.msra.mxu0 0.0
    %215 = vmatprep.subr.mxu0 0.0
    %216 = vmatpush1.msra.mxu0 0.0
    %217 = vmatprep.mubr.f32.mxu0 0.0
    %218 = vmatmul.mubr.f32.gmra.mrb[0].mxu0 %v151
    %v219 = vpop.f32.mrb[0].mxu0
    %v220 = vadd.f32 0.0, %v219
    %v221 = vpop.f32.mrb[0].mxu0
    %222 = vdwg.mxu0
    %v223 = vadd.f32 %v141, %v220
    %v224 = vxor.u32 %v223, 2147483648
    %v225 = vmul.f32 %v224, 1.442695
    %v226 = vpow.pop %v225
    %v227 = vadd.f32 %v226, 1.0
    %v228 = vrcp.pop %v227
    %v229 = vmul.f32 1.0, %v228
    %v231 = vlaneseq
    %v232 = vshrl.u32 %v231, 7
    %v233 = vsub.s32 0, %v232
    %v234 = vrot.slane %v60, %v233
    %235 = vrot.lane.b32.xlu0 %v234, 64
    %v236 = vpop.permute.xlu0 %235
    %v238 = vadd.f32 %v220, %v236
    %240 = vrot.lane.b32.xlu0 %v238, 64
    %v241 = vpop.permute.xlu0 %240
    %v243 = vmul.f32 %v229, %v241
    %245 = vrot.lane.b32.xlu0 %v243, 64
    %v246 = vpop.permute.xlu0 %245
    %v248 = vadd.f32 %v141, %v246
    %v249 = vtanh.pop %v248
    %v250 = vsub.f32 1.0, %v229
    %252 = vrot.lane.b32.xlu0 %v249, 96
    %v253 = vpop.permute.xlu0 %252
    %v255 = vmul.f32 %v250, %v253
    %v256 = vmul.f32 %v229, 0.0
    %v257 = vadd.f32 %v255, %v256
    %259 = vrot.lane.b32.xlu0 %v257, 96
    %v260 = vpop.permute.xlu0 %259
    %vm262 = vcmask 254976
    %263 = vst.msk [vmem:[#allocation2] sm:$0x3] %vm262, %v260
    %v264 = vsel %vm149, %v260, 0
    %266 = vmatprep.subr.mxu0 0.0
    %267 = vmatpush1.msra.mxu0 %v55
    %268 = vmatprep.subr.mxu0 0.0
    %269 = vmatpush1.msra.mxu0 %v56
    %270 = vmatprep.subr.mxu0 0.0
    %271 = vmatpush1.msra.mxu0 %v57
    %272 = vmatprep.subr.mxu0 0.0
    %273 = vmatpush1.msra.mxu0 %v58
    %274 = vmatprep.subr.mxu0 0.0
    %275 = vmatpush1.msra.mxu0 0.0
    %276 = vmatprep.subr.mxu0 0.0
    %277 = vmatpush1.msra.mxu0 0.0
    %278 = vmatprep.subr.mxu0 0.0
    %279 = vmatpush1.msra.mxu0 0.0
    %280 = vmatprep.subr.mxu0 0.0
    %281 = vmatpush1.msra.mxu0 0.0
    %282 = vmatprep.subr.mxu0 0.0
    %283 = vmatpush1.msra.mxu0 0.0
    %284 = vmatprep.subr.mxu0 0.0
    %285 = vmatpush1.msra.mxu0 0.0
    %286 = vmatprep.subr.mxu0 0.0
    %287 = vmatpush1.msra.mxu0 0.0
    %288 = vmatprep.subr.mxu0 0.0
    %289 = vmatpush1.msra.mxu0 0.0
    %290 = vmatprep.subr.mxu0 0.0
    %291 = vmatpush1.msra.mxu0 0.0
    %292 = vmatprep.subr.mxu0 0.0
    %293 = vmatpush1.msra.mxu0 0.0
    %294 = vmatprep.subr.mxu0 0.0
    %295 = vmatpush1.msra.mxu0 0.0
    %296 = vmatprep.subr.mxu0 0.0
    %297 = vmatpush1.msra.mxu0 0.0
    %298 = vmatprep.subr.mxu0 0.0
    %299 = vmatpush1.msra.mxu0 0.0
    %300 = vmatprep.subr.mxu0 0.0
    %301 = vmatpush1.msra.mxu0 0.0
    %302 = vmatprep.subr.mxu0 0.0
    %303 = vmatpush1.msra.mxu0 0.0
    %304 = vmatprep.subr.mxu0 0.0
    %305 = vmatpush1.msra.mxu0 0.0
    %306 = vmatprep.subr.mxu0 0.0
    %307 = vmatpush1.msra.mxu0 0.0
    %308 = vmatprep.subr.mxu0 0.0
    %309 = vmatpush1.msra.mxu0 0.0
    %310 = vmatprep.subr.mxu0 0.0
    %311 = vmatpush1.msra.mxu0 0.0
    %312 = vmatprep.subr.mxu0 0.0
    %313 = vmatpush1.msra.mxu0 0.0
    %314 = vmatprep.subr.mxu0 0.0
    %315 = vmatpush1.msra.mxu0 0.0
    %316 = vmatprep.subr.mxu0 0.0
    %317 = vmatpush1.msra.mxu0 0.0
    %318 = vmatprep.subr.mxu0 0.0
    %319 = vmatpush1.msra.mxu0 0.0
    %320 = vmatprep.subr.mxu0 0.0
    %321 = vmatpush1.msra.mxu0 0.0
    %322 = vmatprep.subr.mxu0 0.0
    %323 = vmatpush1.msra.mxu0 0.0
    %324 = vmatprep.subr.mxu0 0.0
    %325 = vmatpush1.msra.mxu0 0.0
    %326 = vmatprep.subr.mxu0 0.0
    %327 = vmatpush1.msra.mxu0 0.0
    %328 = vmatprep.subr.mxu0 0.0
    %329 = vmatpush1.msra.mxu0 0.0
    %330 = vmatprep.mubr.f32.mxu0 0.0
    %331 = vmatmul.mubr.f32.gmra.mrb[0].mxu0 %v264
    %v332 = vpop.f32.mrb[0].mxu0
    %v333 = vadd.f32 0.0, %v332
    %v334 = vpop.f32.mrb[0].mxu0
    %335 = vdwg.mxu0
    %v337 = vrot.slane %v333, 6
    %v339 = vadd.f32 %v141, %v337
    %v340 = vxor.u32 %v339, 2147483648
    %v341 = vmul.f32 %v340, 1.442695
    %v342 = vpow.pop %v341
    %v343 = vadd.f32 %v342, 1.0
    %v344 = vrcp.pop %v343
    %v345 = vmul.f32 1.0, %v344
    %v346 = vadd.f32 %v333, %v236
    %v348 = vrot.slane %v346, 6
    %349 = vrot.lane.b32.xlu0 %v348, 64
    %v350 = vpop.permute.xlu0 %349
    %v352 = vmul.f32 %v345, %v350
    %354 = vrot.lane.b32.xlu0 %v352, 64
    %v355 = vpop.permute.xlu0 %354
    %v357 = vadd.f32 %v141, %v355
    %v358 = vtanh.pop %v357
    %v359 = vsub.f32 1.0, %v345
    %361 = vrot.lane.b32.xlu0 %v358, 96
    %v362 = vpop.permute.xlu0 %361
    %v364 = vmul.f32 %v359, %v362
    %v365 = vrot.slane %v257, 6
    %v367 = vmul.f32 %v345, %v365
    %v368 = vadd.f32 %v364, %v367
    %370 = vrot.lane.b32.xlu0 %v368, 96
    %v371 = vpop.permute.xlu0 %370
    %vm373 = vcmask 257026
    %374 = vst.msk [vmem:[#allocation2] sm:$0xc] %vm373, %v371
    %v375 = vrot.slane %v368, 2
    %376 = vrot.lane.b32.xlu0 %v375, 96
    %v377 = vpop.permute.xlu0 %376
    %v378 = vsel %vm149, %v377, 0
    %380 = vmatprep.subr.mxu0 0.0
    %381 = vmatpush1.msra.mxu0 %v55
    %382 = vmatprep.subr.mxu0 0.0
    %383 = vmatpush1.msra.mxu0 %v56
    %384 = vmatprep.subr.mxu0 0.0
    %385 = vmatpush1.msra.mxu0 %v57
    %386 = vmatprep.subr.mxu0 0.0
    %387 = vmatpush1.msra.mxu0 %v58
    %388 = vmatprep.subr.mxu0 0.0
    %389 = vmatpush1.msra.mxu0 0.0
    %390 = vmatprep.subr.mxu0 0.0
    %391 = vmatpush1.msra.mxu0 0.0
    %392 = vmatprep.subr.mxu0 0.0
    %393 = vmatpush1.msra.mxu0 0.0
    %394 = vmatprep.subr.mxu0 0.0
    %395 = vmatpush1.msra.mxu0 0.0
    %396 = vmatprep.subr.mxu0 0.0
    %397 = vmatpush1.msra.mxu0 0.0
    %398 = vmatprep.subr.mxu0 0.0
    %399 = vmatpush1.msra.mxu0 0.0
    %400 = vmatprep.subr.mxu0 0.0
    %401 = vmatpush1.msra.mxu0 0.0
    %402 = vmatprep.subr.mxu0 0.0
    %403 = vmatpush1.msra.mxu0 0.0
    %404 = vmatprep.subr.mxu0 0.0
    %405 = vmatpush1.msra.mxu0 0.0
    %406 = vmatprep.subr.mxu0 0.0
    %407 = vmatpush1.msra.mxu0 0.0
    %408 = vmatprep.subr.mxu0 0.0
    %409 = vmatpush1.msra.mxu0 0.0
    %410 = vmatprep.subr.mxu0 0.0
    %411 = vmatpush1.msra.mxu0 0.0
    %412 = vmatprep.subr.mxu0 0.0
    %413 = vmatpush1.msra.mxu0 0.0
    %414 = vmatprep.subr.mxu0 0.0
    %415 = vmatpush1.msra.mxu0 0.0
    %416 = vmatprep.subr.mxu0 0.0
    %417 = vmatpush1.msra.mxu0 0.0
    %418 = vmatprep.subr.mxu0 0.0
    %419 = vmatpush1.msra.mxu0 0.0
    %420 = vmatprep.subr.mxu0 0.0
    %421 = vmatpush1.msra.mxu0 0.0
    %422 = vmatprep.subr.mxu0 0.0
    %423 = vmatpush1.msra.mxu0 0.0
    %424 = vmatprep.subr.mxu0 0.0
    %425 = vmatpush1.msra.mxu0 0.0
    %426 = vmatprep.subr.mxu0 0.0
    %427 = vmatpush1.msra.mxu0 0.0
    %428 = vmatprep.subr.mxu0 0.0
    %429 = vmatpush1.msra.mxu0 0.0
    %430 = vmatprep.subr.mxu0 0.0
    %431 = vmatpush1.msra.mxu0 0.0
    %432 = vmatprep.subr.mxu0 0.0
    %433 = vmatpush1.msra.mxu0 0.0
    %434 = vmatprep.subr.mxu0 0.0
    %435 = vmatpush1.msra.mxu0 0.0
    %436 = vmatprep.subr.mxu0 0.0
    %437 = vmatpush1.msra.mxu0 0.0
    %438 = vmatprep.subr.mxu0 0.0
    %439 = vmatpush1.msra.mxu0 0.0
    %440 = vmatprep.subr.mxu0 0.0
    %441 = vmatpush1.msra.mxu0 0.0
    %442 = vmatprep.subr.mxu0 0.0
    %443 = vmatpush1.msra.mxu0 0.0
    %444 = vmatprep.mubr.f32.mxu0 0.0
    %445 = vmatmul.mubr.f32.gmra.mrb[0].mxu0 %v378
    %v446 = vpop.f32.mrb[0].mxu0
    %v447 = vadd.f32 0.0, %v446
    %v448 = vpop.f32.mrb[0].mxu0
    %449 = vdwg.mxu0
    %v451 = vrot.slane %v447, 4
    %v453 = vadd.f32 %v141, %v451
    %v454 = vxor.u32 %v453, 2147483648
    %v455 = vmul.f32 %v454, 1.442695
    %v456 = vpow.pop %v455
    %v457 = vadd.f32 %v456, 1.0
    %v458 = vrcp.pop %v457
    %v459 = vmul.f32 1.0, %v458
    %v460 = vadd.f32 %v447, %v236
    %v462 = vrot.slane %v460, 4
    %463 = vrot.lane.b32.xlu0 %v462, 64
    %v464 = vpop.permute.xlu0 %463
    %v466 = vmul.f32 %v459, %v464
    %468 = vrot.lane.b32.xlu0 %v466, 64
    %v469 = vpop.permute.xlu0 %468
    %v471 = vadd.f32 %v141, %v469
    %v472 = vtanh.pop %v471
    %v473 = vsub.f32 1.0, %v459
    %475 = vrot.lane.b32.xlu0 %v472, 96
    %v476 = vpop.permute.xlu0 %475
    %v478 = vmul.f32 %v473, %v476
    %v479 = vrot.slane %v368, 6
    %v481 = vmul.f32 %v459, %v479
    %v482 = vadd.f32 %v478, %v481
    %484 = vrot.lane.b32.xlu0 %v482, 96
    %v485 = vpop.permute.xlu0 %484
    %vm487 = vcmask 259076
    %488 = vst.msk [vmem:[#allocation2] sm:$0x30] %vm487, %v485
    %v489 = vrot.slane %v482, 4
    %490 = vrot.lane.b32.xlu0 %v489, 96
    %v491 = vpop.permute.xlu0 %490
    %v492 = vsel %vm149, %v491, 0
    %494 = vmatprep.subr.mxu0 0.0
    %495 = vmatpush1.msra.mxu0 %v55
    %496 = vmatprep.subr.mxu0 0.0
    %497 = vmatpush1.msra.mxu0 %v56
    %498 = vmatprep.subr.mxu0 0.0
    %499 = vmatpush1.msra.mxu0 %v57
    %500 = vmatprep.subr.mxu0 0.0
    %501 = vmatpush1.msra.mxu0 %v58
    %502 = vmatprep.subr.mxu0 0.0
    %503 = vmatpush1.msra.mxu0 0.0
    %504 = vmatprep.subr.mxu0 0.0
    %505 = vmatpush1.msra.mxu0 0.0
    %506 = vmatprep.subr.mxu0 0.0
    %507 = vmatpush1.msra.mxu0 0.0
    %508 = vmatprep.subr.mxu0 0.0
    %509 = vmatpush1.msra.mxu0 0.0
    %510 = vmatprep.subr.mxu0 0.0
    %511 = vmatpush1.msra.mxu0 0.0
    %512 = vmatprep.subr.mxu0 0.0
    %513 = vmatpush1.msra.mxu0 0.0
    %514 = vmatprep.subr.mxu0 0.0
    %515 = vmatpush1.msra.mxu0 0.0
    %516 = vmatprep.subr.mxu0 0.0
    %517 = vmatpush1.msra.mxu0 0.0
    %518 = vmatprep.subr.mxu0 0.0
    %519 = vmatpush1.msra.mxu0 0.0
    %520 = vmatprep.subr.mxu0 0.0
    %521 = vmatpush1.msra.mxu0 0.0
    %522 = vmatprep.subr.mxu0 0.0
    %523 = vmatpush1.msra.mxu0 0.0
    %524 = vmatprep.subr.mxu0 0.0
    %525 = vmatpush1.msra.mxu0 0.0
    %526 = vmatprep.subr.mxu0 0.0
    %527 = vmatpush1.msra.mxu0 0.0
    %528 = vmatprep.subr.mxu0 0.0
    %529 = vmatpush1.msra.mxu0 0.0
    %530 = vmatprep.subr.mxu0 0.0
    %531 = vmatpush1.msra.mxu0 0.0
    %532 = vmatprep.subr.mxu0 0.0
    %533 = vmatpush1.msra.mxu0 0.0
    %534 = vmatprep.subr.mxu0 0.0
    %535 = vmatpush1.msra.mxu0 0.0
    %536 = vmatprep.subr.mxu0 0.0
    %537 = vmatpush1.msra.mxu0 0.0
    %538 = vmatprep.subr.mxu0 0.0
    %539 = vmatpush1.msra.mxu0 0.0
    %540 = vmatprep.subr.mxu0 0.0
    %541 = vmatpush1.msra.mxu0 0.0
    %542 = vmatprep.subr.mxu0 0.0
    %543 = vmatpush1.msra.mxu0 0.0
    %544 = vmatprep.subr.mxu0 0.0
    %545 = vmatpush1.msra.mxu0 0.0
    %546 = vmatprep.subr.mxu0 0.0
    %547 = vmatpush1.msra.mxu0 0.0
    %548 = vmatprep.subr.mxu0 0.0
    %549 = vmatpush1.msra.mxu0 0.0
    %550 = vmatprep.subr.mxu0 0.0
    %551 = vmatpush1.msra.mxu0 0.0
    %552 = vmatprep.subr.mxu0 0.0
    %553 = vmatpush1.msra.mxu0 0.0
    %554 = vmatprep.subr.mxu0 0.0
    %555 = vmatpush1.msra.mxu0 0.0
    %556 = vmatprep.subr.mxu0 0.0
    %557 = vmatpush1.msra.mxu0 0.0
    %558 = vmatprep.mubr.f32.mxu0 0.0
    %559 = vmatmul.mubr.f32.gmra.mrb[0].mxu0 %v492
    %v560 = vpop.f32.mrb[0].mxu0
    %v561 = vadd.f32 0.0, %v560
    %v562 = vpop.f32.mrb[0].mxu0
    %563 = vdwg.mxu0
    %v565 = vrot.slane %v561, 2
    %v567 = vadd.f32 %v141, %v565
    %v568 = vxor.u32 %v567, 2147483648
    %v569 = vmul.f32 %v568, 1.442695
    %v570 = vpow.pop %v569
    %v571 = vadd.f32 %v570, 1.0
    %v572 = vrcp.pop %v571
    %v573 = vmul.f32 1.0, %v572
    %v574 = vadd.f32 %v561, %v236
    %v576 = vrot.slane %v574, 2
    %577 = vrot.lane.b32.xlu0 %v576, 64
    %v578 = vpop.permute.xlu0 %577
    %v580 = vmul.f32 %v573, %v578
    %582 = vrot.lane.b32.xlu0 %v580, 64
    %v583 = vpop.permute.xlu0 %582
    %v585 = vadd.f32 %v141, %v583
    %v586 = vtanh.pop %v585
    %v587 = vsub.f32 1.0, %v573
    %589 = vrot.lane.b32.xlu0 %v586, 96
    %v590 = vpop.permute.xlu0 %589
    %v592 = vmul.f32 %v587, %v590
    %v593 = vrot.slane %v482, 6
    %v595 = vmul.f32 %v573, %v593
    %v596 = vadd.f32 %v592, %v595
    %598 = vrot.lane.b32.xlu0 %v596, 96
    %v599 = vpop.permute.xlu0 %598
    %vm601 = vcmask 261126
    %602 = vst.msk [vmem:[#allocation2] sm:$0xc0] %vm601, %v599
    %v603 = vrot.slane %v596, 6
    %604 = vrot.lane.b32.xlu0 %v603, 96
    %v605 = vpop.permute.xlu0 %604
    %v606 = vsel %vm149, %v605, 0
    %608 = vmatprep.subr.mxu0 0.0
    %609 = vmatpush1.msra.mxu0 %v55
    %610 = vmatprep.subr.mxu0 0.0
    %611 = vmatpush1.msra.mxu0 %v56
    %612 = vmatprep.subr.mxu0 0.0
    %613 = vmatpush1.msra.mxu0 %v57
    %614 = vmatprep.subr.mxu0 0.0
    %615 = vmatpush1.msra.mxu0 %v58
    %616 = vmatprep.subr.mxu0 0.0
    %617 = vmatpush1.msra.mxu0 0.0
    %618 = vmatprep.subr.mxu0 0.0
    %619 = vmatpush1.msra.mxu0 0.0
    %620 = vmatprep.subr.mxu0 0.0
    %621 = vmatpush1.msra.mxu0 0.0
    %622 = vmatprep.subr.mxu0 0.0
    %623 = vmatpush1.msra.mxu0 0.0
    %624 = vmatprep.subr.mxu0 0.0
    %625 = vmatpush1.msra.mxu0 0.0
    %626 = vmatprep.subr.mxu0 0.0
    %627 = vmatpush1.msra.mxu0 0.0
    %628 = vmatprep.subr.mxu0 0.0
    %629 = vmatpush1.msra.mxu0 0.0
    %630 = vmatprep.subr.mxu0 0.0
    %631 = vmatpush1.msra.mxu0 0.0
    %632 = vmatprep.subr.mxu0 0.0
    %633 = vmatpush1.msra.mxu0 0.0
    %634 = vmatprep.subr.mxu0 0.0
    %635 = vmatpush1.msra.mxu0 0.0
    %636 = vmatprep.subr.mxu0 0.0
    %637 = vmatpush1.msra.mxu0 0.0
    %638 = vmatprep.subr.mxu0 0.0
    %639 = vmatpush1.msra.mxu0 0.0
    %640 = vmatprep.subr.mxu0 0.0
    %641 = vmatpush1.msra.mxu0 0.0
    %642 = vmatprep.subr.mxu0 0.0
    %643 = vmatpush1.msra.mxu0 0.0
    %644 = vmatprep.subr.mxu0 0.0
    %645 = vmatpush1.msra.mxu0 0.0
    %646 = vmatprep.subr.mxu0 0.0
    %647 = vmatpush1.msra.mxu0 0.0
    %648 = vmatprep.subr.mxu0 0.0
    %649 = vmatpush1.msra.mxu0 0.0
    %650 = vmatprep.subr.mxu0 0.0
    %651 = vmatpush1.msra.mxu0 0.0
    %652 = vmatprep.subr.mxu0 0.0
    %653 = vmatpush1.msra.mxu0 0.0
    %654 = vmatprep.subr.mxu0 0.0
    %655 = vmatpush1.msra.mxu0 0.0
    %656 = vmatprep.subr.mxu0 0.0
    %657 = vmatpush1.msra.mxu0 0.0
    %658 = vmatprep.subr.mxu0 0.0
    %659 = vmatpush1.msra.mxu0 0.0
    %660 = vmatprep.subr.mxu0 0.0
    %661 = vmatpush1.msra.mxu0 0.0
    %662 = vmatprep.subr.mxu0 0.0
    %663 = vmatpush1.msra.mxu0 0.0
    %664 = vmatprep.subr.mxu0 0.0
    %665 = vmatpush1.msra.mxu0 0.0
    %666 = vmatprep.subr.mxu0 0.0
    %667 = vmatpush1.msra.mxu0 0.0
    %668 = vmatprep.subr.mxu0 0.0
    %669 = vmatpush1.msra.mxu0 0.0
    %670 = vmatprep.subr.mxu0 0.0
    %671 = vmatpush1.msra.mxu0 0.0
    %672 = vmatprep.mubr.f32.mxu0 0.0
    %673 = vmatmul.mubr.f32.gmra.mrb[0].mxu0 %v606
    %v674 = vpop.f32.mrb[0].mxu0
    %v675 = vadd.f32 0.0, %v674
    %v676 = vpop.f32.mrb[0].mxu0
    %677 = vdwg.mxu0
    %v678 = vadd.f32 %v146, %v675
    %v679 = vxor.u32 %v678, 2147483648
    %v680 = vmul.f32 %v679, 1.442695
    %v681 = vpow.pop %v680
    %v682 = vadd.f32 %v681, 1.0
    %v683 = vrcp.pop %v682
    %v684 = vmul.f32 1.0, %v683
    %v685 = vadd.f32 %v675, %v236
    %687 = vrot.lane.b32.xlu0 %v685, 64
    %v688 = vpop.permute.xlu0 %687
    %v690 = vmul.f32 %v684, %v688
    %692 = vrot.lane.b32.xlu0 %v690, 64
    %v693 = vpop.permute.xlu0 %692
    %v695 = vadd.f32 %v146, %v693
    %v696 = vtanh.pop %v695
    %v697 = vsub.f32 1.0, %v684
    %699 = vrot.lane.b32.xlu0 %v696, 96
    %v700 = vpop.permute.xlu0 %699
    %v702 = vmul.f32 %v697, %v700
    %v704 = vmul.f32 %v684, %v603
    %v705 = vadd.f32 %v702, %v704
    %707 = vrot.lane.b32.xlu0 %v705, 96
    %v708 = vpop.permute.xlu0 %707
    %710 = vst.msk [vmem:[#allocation2 + $0x8] sm:$0x3] %vm262, %v708
    %v711 = vsel %vm149, %v708, 0
    %713 = vmatprep.subr.mxu0 0.0
    %714 = vmatpush1.msra.mxu0 %v55
    %715 = vmatprep.subr.mxu0 0.0
    %716 = vmatpush1.msra.mxu0 %v56
    %717 = vmatprep.subr.mxu0 0.0
    %718 = vmatpush1.msra.mxu0 %v57
    %719 = vmatprep.subr.mxu0 0.0
    %720 = vmatpush1.msra.mxu0 %v58
    %721 = vmatprep.subr.mxu0 0.0
    %722 = vmatpush1.msra.mxu0 0.0
    %723 = vmatprep.subr.mxu0 0.0
    %724 = vmatpush1.msra.mxu0 0.0
    %725 = vmatprep.subr.mxu0 0.0
    %726 = vmatpush1.msra.mxu0 0.0
    %727 = vmatprep.subr.mxu0 0.0
    %728 = vmatpush1.msra.mxu0 0.0
    %729 = vmatprep.subr.mxu0 0.0
    %730 = vmatpush1.msra.mxu0 0.0
    %731 = vmatprep.subr.mxu0 0.0
    %732 = vmatpush1.msra.mxu0 0.0
    %733 = vmatprep.subr.mxu0 0.0
    %734 = vmatpush1.msra.mxu0 0.0
    %735 = vmatprep.subr.mxu0 0.0
    %736 = vmatpush1.msra.mxu0 0.0
    %737 = vmatprep.subr.mxu0 0.0
    %738 = vmatpush1.msra.mxu0 0.0
    %739 = vmatprep.subr.mxu0 0.0
    %740 = vmatpush1.msra.mxu0 0.0
    %741 = vmatprep.subr.mxu0 0.0
    %742 = vmatpush1.msra.mxu0 0.0
    %743 = vmatprep.subr.mxu0 0.0
    %744 = vmatpush1.msra.mxu0 0.0
    %745 = vmatprep.subr.mxu0 0.0
    %746 = vmatpush1.msra.mxu0 0.0
    %747 = vmatprep.subr.mxu0 0.0
    %748 = vmatpush1.msra.mxu0 0.0
    %749 = vmatprep.subr.mxu0 0.0
    %750 = vmatpush1.msra.mxu0 0.0
    %751 = vmatprep.subr.mxu0 0.0
    %752 = vmatpush1.msra.mxu0 0.0
    %753 = vmatprep.subr.mxu0 0.0
    %754 = vmatpush1.msra.mxu0 0.0
    %755 = vmatprep.subr.mxu0 0.0
    %756 = vmatpush1.msra.mxu0 0.0
    %757 = vmatprep.subr.mxu0 0.0
    %758 = vmatpush1.msra.mxu0 0.0
    %759 = vmatprep.subr.mxu0 0.0
    %760 = vmatpush1.msra.mxu0 0.0
    %761 = vmatprep.subr.mxu0 0.0
    %762 = vmatpush1.msra.mxu0 0.0
    %763 = vmatprep.subr.mxu0 0.0
    %764 = vmatpush1.msra.mxu0 0.0
    %765 = vmatprep.subr.mxu0 0.0
    %766 = vmatpush1.msra.mxu0 0.0
    %767 = vmatprep.subr.mxu0 0.0
    %768 = vmatpush1.msra.mxu0 0.0
    %769 = vmatprep.subr.mxu0 0.0
    %770 = vmatpush1.msra.mxu0 0.0
    %771 = vmatprep.subr.mxu0 0.0
    %772 = vmatpush1.msra.mxu0 0.0
    %773 = vmatprep.subr.mxu0 0.0
    %774 = vmatpush1.msra.mxu0 0.0
    %775 = vmatprep.subr.mxu0 0.0
    %776 = vmatpush1.msra.mxu0 0.0
    %777 = vmatprep.mubr.f32.mxu0 0.0
    %778 = vmatmul.mubr.f32.gmra.mrb[0].mxu0 %v711
    %v779 = vpop.f32.mrb[0].mxu0
    %v780 = vadd.f32 0.0, %v779
    %v781 = vpop.f32.mrb[0].mxu0
    %782 = vdwg.mxu0
    %v784 = vrot.slane %v780, 6
    %v786 = vadd.f32 %v146, %v784
    %v787 = vxor.u32 %v786, 2147483648
    %v788 = vmul.f32 %v787, 1.442695
    %v789 = vpow.pop %v788
    %v790 = vadd.f32 %v789, 1.0
    %v791 = vrcp.pop %v790
    %v792 = vmul.f32 1.0, %v791
    %v793 = vadd.f32 %v780, %v236
    %v795 = vrot.slane %v793, 6
    %796 = vrot.lane.b32.xlu0 %v795, 64
    %v797 = vpop.permute.xlu0 %796
    %v799 = vmul.f32 %v792, %v797
    %801 = vrot.lane.b32.xlu0 %v799, 64
    %v802 = vpop.permute.xlu0 %801
    %v804 = vadd.f32 %v146, %v802
    %v805 = vtanh.pop %v804
    %v806 = vsub.f32 1.0, %v792
    %808 = vrot.lane.b32.xlu0 %v805, 96
    %v809 = vpop.permute.xlu0 %808
    %v811 = vmul.f32 %v806, %v809
    %v812 = vrot.slane %v705, 6
    %v814 = vmul.f32 %v792, %v812
    %v815 = vadd.f32 %v811, %v814
    %817 = vrot.lane.b32.xlu0 %v815, 96
    %v818 = vpop.permute.xlu0 %817
    %820 = vst.msk [vmem:[#allocation2 + $0x8] sm:$0xc] %vm373, %v818
    %v821 = vrot.slane %v815, 2
    %822 = vrot.lane.b32.xlu0 %v821, 96
    %v823 = vpop.permute.xlu0 %822
    %v824 = vsel %vm149, %v823, 0
    %826 = vmatprep.subr.mxu0 0.0
    %827 = vmatpush1.msra.mxu0 %v55
    %828 = vmatprep.subr.mxu0 0.0
    %829 = vmatpush1.msra.mxu0 %v56
    %830 = vmatprep.subr.mxu0 0.0
    %831 = vmatpush1.msra.mxu0 %v57
    %832 = vmatprep.subr.mxu0 0.0
    %833 = vmatpush1.msra.mxu0 %v58
    %834 = vmatprep.subr.mxu0 0.0
    %835 = vmatpush1.msra.mxu0 0.0
    %836 = vmatprep.subr.mxu0 0.0
    %837 = vmatpush1.msra.mxu0 0.0
    %838 = vmatprep.subr.mxu0 0.0
    %839 = vmatpush1.msra.mxu0 0.0
    %840 = vmatprep.subr.mxu0 0.0
    %841 = vmatpush1.msra.mxu0 0.0
    %842 = vmatprep.subr.mxu0 0.0
    %843 = vmatpush1.msra.mxu0 0.0
    %844 = vmatprep.subr.mxu0 0.0
    %845 = vmatpush1.msra.mxu0 0.0
    %846 = vmatprep.subr.mxu0 0.0
    %847 = vmatpush1.msra.mxu0 0.0
    %848 = vmatprep.subr.mxu0 0.0
    %849 = vmatpush1.msra.mxu0 0.0
    %850 = vmatprep.subr.mxu0 0.0
    %851 = vmatpush1.msra.mxu0 0.0
    %852 = vmatprep.subr.mxu0 0.0
    %853 = vmatpush1.msra.mxu0 0.0
    %854 = vmatprep.subr.mxu0 0.0
    %855 = vmatpush1.msra.mxu0 0.0
    %856 = vmatprep.subr.mxu0 0.0
    %857 = vmatpush1.msra.mxu0 0.0
    %858 = vmatprep.subr.mxu0 0.0
    %859 = vmatpush1.msra.mxu0 0.0
    %860 = vmatprep.subr.mxu0 0.0
    %861 = vmatpush1.msra.mxu0 0.0
    %862 = vmatprep.subr.mxu0 0.0
    %863 = vmatpush1.msra.mxu0 0.0
    %864 = vmatprep.subr.mxu0 0.0
    %865 = vmatpush1.msra.mxu0 0.0
    %866 = vmatprep.subr.mxu0 0.0
    %867 = vmatpush1.msra.mxu0 0.0
    %868 = vmatprep.subr.mxu0 0.0
    %869 = vmatpush1.msra.mxu0 0.0
    %870 = vmatprep.subr.mxu0 0.0
    %871 = vmatpush1.msra.mxu0 0.0
    %872 = vmatprep.subr.mxu0 0.0
    %873 = vmatpush1.msra.mxu0 0.0
    %874 = vmatprep.subr.mxu0 0.0
    %875 = vmatpush1.msra.mxu0 0.0
    %876 = vmatprep.subr.mxu0 0.0
    %877 = vmatpush1.msra.mxu0 0.0
    %878 = vmatprep.subr.mxu0 0.0
    %879 = vmatpush1.msra.mxu0 0.0
    %880 = vmatprep.subr.mxu0 0.0
    %881 = vmatpush1.msra.mxu0 0.0
    %882 = vmatprep.subr.mxu0 0.0
    %883 = vmatpush1.msra.mxu0 0.0
    %884 = vmatprep.subr.mxu0 0.0
    %885 = vmatpush1.msra.mxu0 0.0
    %886 = vmatprep.subr.mxu0 0.0
    %887 = vmatpush1.msra.mxu0 0.0
    %888 = vmatprep.subr.mxu0 0.0
    %889 = vmatpush1.msra.mxu0 0.0
    %890 = vmatprep.mubr.f32.mxu0 0.0
    %891 = vmatmul.mubr.f32.gmra.mrb[0].mxu0 %v824
    %v892 = vpop.f32.mrb[0].mxu0
    %v893 = vadd.f32 0.0, %v892
    %v894 = vpop.f32.mrb[0].mxu0
    %895 = vdwg.mxu0
    %v897 = vrot.slane %v893, 4
    %v899 = vadd.f32 %v146, %v897
    %v900 = vxor.u32 %v899, 2147483648
    %v901 = vmul.f32 %v900, 1.442695
    %v902 = vpow.pop %v901
    %v903 = vadd.f32 %v902, 1.0
    %v904 = vrcp.pop %v903
    %v905 = vmul.f32 1.0, %v904
    %v906 = vadd.f32 %v893, %v236
    %v908 = vrot.slane %v906, 4
    %909 = vrot.lane.b32.xlu0 %v908, 64
    %v910 = vpop.permute.xlu0 %909
    %v912 = vmul.f32 %v905, %v910
    %914 = vrot.lane.b32.xlu0 %v912, 64
    %v915 = vpop.permute.xlu0 %914
    %v917 = vadd.f32 %v146, %v915
    %v918 = vtanh.pop %v917
    %v919 = vsub.f32 1.0, %v905
    %921 = vrot.lane.b32.xlu0 %v918, 96
    %v922 = vpop.permute.xlu0 %921
    %v924 = vmul.f32 %v919, %v922
    %v925 = vrot.slane %v815, 6
    %v927 = vmul.f32 %v905, %v925
    %v928 = vadd.f32 %v924, %v927
    %930 = vrot.lane.b32.xlu0 %v928, 96
    %v931 = vpop.permute.xlu0 %930
    %933 = vst.msk [vmem:[#allocation2 + $0x8] sm:$0x30] %vm487, %v931
    %v934 = vrot.slane %v928, 4
    %935 = vrot.lane.b32.xlu0 %v934, 96
    %v936 = vpop.permute.xlu0 %935
    %v937 = vsel %vm149, %v936, 0
    %939 = vmatprep.subr.mxu0 0.0
    %940 = vmatpush1.msra.mxu0 %v55
    %941 = vmatprep.subr.mxu0 0.0
    %942 = vmatpush1.msra.mxu0 %v56
    %943 = vmatprep.subr.mxu0 0.0
    %944 = vmatpush1.msra.mxu0 %v57
    %945 = vmatprep.subr.mxu0 0.0
    %946 = vmatpush1.msra.mxu0 %v58
    %947 = vmatprep.subr.mxu0 0.0
    %948 = vmatpush1.msra.mxu0 0.0
    %949 = vmatprep.subr.mxu0 0.0
    %950 = vmatpush1.msra.mxu0 0.0
    %951 = vmatprep.subr.mxu0 0.0
    %952 = vmatpush1.msra.mxu0 0.0
    %953 = vmatprep.subr.mxu0 0.0
    %954 = vmatpush1.msra.mxu0 0.0
    %955 = vmatprep.subr.mxu0 0.0
    %956 = vmatpush1.msra.mxu0 0.0
    %957 = vmatprep.subr.mxu0 0.0
    %958 = vmatpush1.msra.mxu0 0.0
    %959 = vmatprep.subr.mxu0 0.0
    %960 = vmatpush1.msra.mxu0 0.0
    %961 = vmatprep.subr.mxu0 0.0
    %962 = vmatpush1.msra.mxu0 0.0
    %963 = vmatprep.subr.mxu0 0.0
    %964 = vmatpush1.msra.mxu0 0.0
    %965 = vmatprep.subr.mxu0 0.0
    %966 = vmatpush1.msra.mxu0 0.0
    %967 = vmatprep.subr.mxu0 0.0
    %968 = vmatpush1.msra.mxu0 0.0
    %969 = vmatprep.subr.mxu0 0.0
    %970 = vmatpush1.msra.mxu0 0.0
    %971 = vmatprep.subr.mxu0 0.0
    %972 = vmatpush1.msra.mxu0 0.0
    %973 = vmatprep.subr.mxu0 0.0
    %974 = vmatpush1.msra.mxu0 0.0
    %975 = vmatprep.subr.mxu0 0.0
    %976 = vmatpush1.msra.mxu0 0.0
    %977 = vmatprep.subr.mxu0 0.0
    %978 = vmatpush1.msra.mxu0 0.0
    %979 = vmatprep.subr.mxu0 0.0
    %980 = vmatpush1.msra.mxu0 0.0
    %981 = vmatprep.subr.mxu0 0.0
    %982 = vmatpush1.msra.mxu0 0.0
    %983 = vmatprep.subr.mxu0 0.0
    %984 = vmatpush1.msra.mxu0 0.0
    %985 = vmatprep.subr.mxu0 0.0
    %986 = vmatpush1.msra.mxu0 0.0
    %987 = vmatprep.subr.mxu0 0.0
    %988 = vmatpush1.msra.mxu0 0.0
    %989 = vmatprep.subr.mxu0 0.0
    %990 = vmatpush1.msra.mxu0 0.0
    %991 = vmatprep.subr.mxu0 0.0
    %992 = vmatpush1.msra.mxu0 0.0
    %993 = vmatprep.subr.mxu0 0.0
    %994 = vmatpush1.msra.mxu0 0.0
    %995 = vmatprep.subr.mxu0 0.0
    %996 = vmatpush1.msra.mxu0 0.0
    %997 = vmatprep.subr.mxu0 0.0
    %998 = vmatpush1.msra.mxu0 0.0
    %999 = vmatprep.subr.mxu0 0.0
    %1000 = vmatpush1.msra.mxu0 0.0
    %1001 = vmatprep.subr.mxu0 0.0
    %1002 = vmatpush1.msra.mxu0 0.0
    %1003 = vmatprep.mubr.f32.mxu0 0.0
    %1004 = vmatmul.mubr.f32.gmra.mrb[0].mxu0 %v937
    %v1005 = vpop.f32.mrb[0].mxu0
    %v1006 = vadd.f32 0.0, %v1005
    %v1007 = vpop.f32.mrb[0].mxu0
    %1008 = vdwg.mxu0
    %v1010 = vrot.slane %v1006, 2
    %v1012 = vadd.f32 %v146, %v1010
    %v1013 = vxor.u32 %v1012, 2147483648
    %v1014 = vmul.f32 %v1013, 1.442695
    %v1015 = vpow.pop %v1014
    %v1016 = vadd.f32 %v1015, 1.0
    %v1017 = vrcp.pop %v1016
    %v1018 = vmul.f32 1.0, %v1017
    %v1019 = vadd.f32 %v1006, %v236
    %v1021 = vrot.slane %v1019, 2
    %1022 = vrot.lane.b32.xlu0 %v1021, 64
    %v1023 = vpop.permute.xlu0 %1022
    %v1025 = vmul.f32 %v1018, %v1023
    %1027 = vrot.lane.b32.xlu0 %v1025, 64
    %v1028 = vpop.permute.xlu0 %1027
    %v1030 = vadd.f32 %v146, %v1028
    %v1031 = vtanh.pop %v1030
    %v1032 = vsub.f32 1.0, %v1018
    %1034 = vrot.lane.b32.xlu0 %v1031, 96
    %v1035 = vpop.permute.xlu0 %1034
    %v1037 = vmul.f32 %v1032, %v1035
    %v1038 = vrot.slane %v928, 6
    %v1040 = vmul.f32 %v1018, %v1038
    %v1041 = vadd.f32 %v1037, %v1040
    %1043 = vrot.lane.b32.xlu0 %v1041, 96
    %v1044 = vpop.permute.xlu0 %1043
    %1046 = vst.msk [vmem:[#allocation2 + $0x8] sm:$0xc0] %vm601, %v1044
    %v1047 = vld [vmem:[%s5] sm:$0xff]
    %v1048 = vld [vmem:[%s5 + $0x8] sm:$0xff]
    %v1049 = vld [vmem:[%s5 + $0x10] sm:$0xff]
    %v1050 = vld [vmem:[%s5 + $0x18] sm:$0xff]
    %v1051 = vld [vmem:[%s6] sm:$0xff]
    %v1052 = vld [vmem:[%s6 + $0x8] sm:$0xff]
    %v1053 = vld [vmem:[%s6 + $0x10] sm:$0xff]
    %v1054 = vld [vmem:[%s6 + $0x18] sm:$0xff]
    %v1055 = vld [vmem:[%s7] sm:$0x1]
    %v1056 = vld [vmem:[%s8] sm:$0x1]
    %v1057 = vld [vmem:[#allocation2] sm:$0xff]
    %v1058 = vld [vmem:[#allocation2 + $0x8] sm:$0xff]
    %v1060 = vlaneseq
    %v1061 = vshrl.u32 %v1060, 7
    %v1062 = vsub.s32 0, %v1061
    %v1063 = vrot.slane %v1055, %v1062
    %v1066 = vsel %vm149, %v1057, 0
    %v1069 = vsel %vm149, %v1058, 0
    %1071 = vmatprep.subr.mxu0 0.0
    %1072 = vmatpush1.msra.mxu0 %v1047
    %1073 = vmatprep.subr.mxu0 0.0
    %1074 = vmatpush1.msra.mxu0 %v1048
    %1075 = vmatprep.subr.mxu0 0.0
    %1076 = vmatpush1.msra.mxu0 %v1049
    %1077 = vmatprep.subr.mxu0 0.0
    %1078 = vmatpush1.msra.mxu0 %v1050
    %1079 = vmatprep.subr.mxu0 0.0
    %1080 = vmatpush1.msra.mxu0 0.0
    %1081 = vmatprep.subr.mxu0 0.0
    %1082 = vmatpush1.msra.mxu0 0.0
    %1083 = vmatprep.subr.mxu0 0.0
    %1084 = vmatpush1.msra.mxu0 0.0
    %1085 = vmatprep.subr.mxu0 0.0
    %1086 = vmatpush1.msra.mxu0 0.0
    %1087 = vmatprep.subr.mxu0 0.0
    %1088 = vmatpush1.msra.mxu0 0.0
    %1089 = vmatprep.subr.mxu0 0.0
    %1090 = vmatpush1.msra.mxu0 0.0
    %1091 = vmatprep.subr.mxu0 0.0
    %1092 = vmatpush1.msra.mxu0 0.0
    %1093 = vmatprep.subr.mxu0 0.0
    %1094 = vmatpush1.msra.mxu0 0.0
    %1095 = vmatprep.subr.mxu0 0.0
    %1096 = vmatpush1.msra.mxu0 0.0
    %1097 = vmatprep.subr.mxu0 0.0
    %1098 = vmatpush1.msra.mxu0 0.0
    %1099 = vmatprep.subr.mxu0 0.0
    %1100 = vmatpush1.msra.mxu0 0.0
    %1101 = vmatprep.subr.mxu0 0.0
    %1102 = vmatpush1.msra.mxu0 0.0
    %1103 = vmatprep.subr.mxu0 0.0
    %1104 = vmatpush1.msra.mxu0 0.0
    %1105 = vmatprep.subr.mxu0 0.0
    %1106 = vmatpush1.msra.mxu0 0.0
    %1107 = vmatprep.subr.mxu0 0.0
    %1108 = vmatpush1.msra.mxu0 0.0
    %1109 = vmatprep.subr.mxu0 0.0
    %1110 = vmatpush1.msra.mxu0 0.0
    %1111 = vmatprep.subr.mxu0 0.0
    %1112 = vmatpush1.msra.mxu0 0.0
    %1113 = vmatprep.subr.mxu0 0.0
    %1114 = vmatpush1.msra.mxu0 0.0
    %1115 = vmatprep.subr.mxu0 0.0
    %1116 = vmatpush1.msra.mxu0 0.0
    %1117 = vmatprep.subr.mxu0 0.0
    %1118 = vmatpush1.msra.mxu0 0.0
    %1119 = vmatprep.subr.mxu0 0.0
    %1120 = vmatpush1.msra.mxu0 0.0
    %1121 = vmatprep.subr.mxu0 0.0
    %1122 = vmatpush1.msra.mxu0 0.0
    %1123 = vmatprep.subr.mxu0 0.0
    %1124 = vmatpush1.msra.mxu0 0.0
    %1125 = vmatprep.subr.mxu0 0.0
    %1126 = vmatpush1.msra.mxu0 0.0
    %1127 = vmatprep.subr.mxu0 0.0
    %1128 = vmatpush1.msra.mxu0 0.0
    %1129 = vmatprep.subr.mxu0 0.0
    %1130 = vmatpush1.msra.mxu0 0.0
    %1131 = vmatprep.subr.mxu0 0.0
    %1132 = vmatpush1.msra.mxu0 0.0
    %1133 = vmatprep.subr.mxu0 0.0
    %1134 = vmatpush1.msra.mxu0 0.0
    %1135 = vmatprep.mubr.f32.mxu0 0.0
    %1136 = vmatmul.mubr.f32.gmra.mrb[0].mxu0 %v1066
    %v1137 = vpop.f32.mrb[0].mxu0
    %v1138 = vadd.f32 %v1063, %v1137
    %v1139 = vpop.f32.mrb[0].mxu0
    %1140 = vmatprep.mubr.f32.mxu0 0.0
    %1141 = vmatmul.mubr.f32.gmra.mrb[0].mxu0 %v1069
    %v1142 = vpop.f32.mrb[0].mxu0
    %v1143 = vadd.f32 %v1063, %v1142
    %v1144 = vpop.f32.mrb[0].mxu0
    %1145 = vdwg.mxu0
    %1146 = vmatprep.subr.mxu0 0.0
    %1147 = vmatpush1.msra.mxu0 %v1051
    %1148 = vmatprep.subr.mxu0 0.0
    %1149 = vmatpush1.msra.mxu0 %v1052
    %1150 = vmatprep.subr.mxu0 0.0
    %1151 = vmatpush1.msra.mxu0 %v1053
    %1152 = vmatprep.subr.mxu0 0.0
    %1153 = vmatpush1.msra.mxu0 %v1054
    %1154 = vmatprep.subr.mxu0 0.0
    %1155 = vmatpush1.msra.mxu0 0.0
    %1156 = vmatprep.subr.mxu0 0.0
    %1157 = vmatpush1.msra.mxu0 0.0
    %1158 = vmatprep.subr.mxu0 0.0
    %1159 = vmatpush1.msra.mxu0 0.0
    %1160 = vmatprep.subr.mxu0 0.0
    %1161 = vmatpush1.msra.mxu0 0.0
    %1162 = vmatprep.subr.mxu0 0.0
    %1163 = vmatpush1.msra.mxu0 0.0
    %1164 = vmatprep.subr.mxu0 0.0
    %1165 = vmatpush1.msra.mxu0 0.0
    %1166 = vmatprep.subr.mxu0 0.0
    %1167 = vmatpush1.msra.mxu0 0.0
    %1168 = vmatprep.subr.mxu0 0.0
    %1169 = vmatpush1.msra.mxu0 0.0
    %1170 = vmatprep.subr.mxu0 0.0
    %1171 = vmatpush1.msra.mxu0 0.0
    %1172 = vmatprep.subr.mxu0 0.0
    %1173 = vmatpush1.msra.mxu0 0.0
    %1174 = vmatprep.subr.mxu0 0.0
    %1175 = vmatpush1.msra.mxu0 0.0
    %1176 = vmatprep.subr.mxu0 0.0
    %1177 = vmatpush1.msra.mxu0 0.0
    %1178 = vmatprep.subr.mxu0 0.0
    %1179 = vmatpush1.msra.mxu0 0.0
    %1180 = vmatprep.subr.mxu0 0.0
    %1181 = vmatpush1.msra.mxu0 0.0
    %1182 = vmatprep.subr.mxu0 0.0
    %1183 = vmatpush1.msra.mxu0 0.0
    %1184 = vmatprep.subr.mxu0 0.0
    %1185 = vmatpush1.msra.mxu0 0.0
    %1186 = vmatprep.subr.mxu0 0.0
    %1187 = vmatpush1.msra.mxu0 0.0
    %1188 = vmatprep.subr.mxu0 0.0
    %1189 = vmatpush1.msra.mxu0 0.0
    %1190 = vmatprep.subr.mxu0 0.0
    %1191 = vmatpush1.msra.mxu0 0.0
    %1192 = vmatprep.subr.mxu0 0.0
    %1193 = vmatpush1.msra.mxu0 0.0
    %1194 = vmatprep.subr.mxu0 0.0
    %1195 = vmatpush1.msra.mxu0 0.0
    %1196 = vmatprep.subr.mxu0 0.0
    %1197 = vmatpush1.msra.mxu0 0.0
    %1198 = vmatprep.subr.mxu0 0.0
    %1199 = vmatpush1.msra.mxu0 0.0
    %1200 = vmatprep.subr.mxu0 0.0
    %1201 = vmatpush1.msra.mxu0 0.0
    %1202 = vmatprep.subr.mxu0 0.0
    %1203 = vmatpush1.msra.mxu0 0.0
    %1204 = vmatprep.subr.mxu0 0.0
    %1205 = vmatpush1.msra.mxu0 0.0
    %1206 = vmatprep.subr.mxu0 0.0
    %1207 = vmatpush1.msra.mxu0 0.0
    %1208 = vmatprep.subr.mxu0 0.0
    %1209 = vmatpush1.msra.mxu0 0.0
    %1210 = vmatprep.mubr.f32.mxu0 0.0
    %1211 = vmatmul.mubr.f32.gmra.mrb[0].mxu0 %v151
    %v1212 = vpop.f32.mrb[0].mxu0
    %v1213 = vadd.f32 0.0, %v1212
    %v1214 = vpop.f32.mrb[0].mxu0
    %1215 = vdwg.mxu0
    %v1216 = vadd.f32 %v1138, %v1213
    %v1217 = vxor.u32 %v1216, 2147483648
    %v1218 = vmul.f32 %v1217, 1.442695
    %v1219 = vpow.pop %v1218
    %v1220 = vadd.f32 %v1219, 1.0
    %v1221 = vrcp.pop %v1220
    %v1222 = vmul.f32 1.0, %v1221
    %v1224 = vlaneseq
    %v1225 = vshrl.u32 %v1224, 7
    %v1226 = vsub.s32 0, %v1225
    %v1227 = vrot.slane %v1056, %v1226
    %1228 = vrot.lane.b32.xlu0 %v1227, 64
    %v1229 = vpop.permute.xlu0 %1228
    %v1231 = vadd.f32 %v1213, %v1229
    %1233 = vrot.lane.b32.xlu0 %v1231, 64
    %v1234 = vpop.permute.xlu0 %1233
    %v1236 = vmul.f32 %v1222, %v1234
    %1238 = vrot.lane.b32.xlu0 %v1236, 64
    %v1239 = vpop.permute.xlu0 %1238
    %v1241 = vadd.f32 %v1138, %v1239
    %v1242 = vtanh.pop %v1241
    %v1243 = vsub.f32 1.0, %v1222
    %1245 = vrot.lane.b32.xlu0 %v1242, 96
    %v1246 = vpop.permute.xlu0 %1245
    %v1248 = vmul.f32 %v1243, %v1246
    %v1249 = vmul.f32 %v1222, 0.0
    %v1250 = vadd.f32 %v1248, %v1249
    %1252 = vrot.lane.b32.xlu0 %v1250, 96
    %v1253 = vpop.permute.xlu0 %1252
    %v1254 = vsel %vm149, %v1253, 0
    %1256 = vmatprep.subr.mxu0 0.0
    %1257 = vmatpush1.msra.mxu0 %v1051
    %1258 = vmatprep.subr.mxu0 0.0
    %1259 = vmatpush1.msra.mxu0 %v1052
    %1260 = vmatprep.subr.mxu0 0.0
    %1261 = vmatpush1.msra.mxu0 %v1053
    %1262 = vmatprep.subr.mxu0 0.0
    %1263 = vmatpush1.msra.mxu0 %v1054
    %1264 = vmatprep.subr.mxu0 0.0
    %1265 = vmatpush1.msra.mxu0 0.0
    %1266 = vmatprep.subr.mxu0 0.0
    %1267 = vmatpush1.msra.mxu0 0.0
    %1268 = vmatprep.subr.mxu0 0.0
    %1269 = vmatpush1.msra.mxu0 0.0
    %1270 = vmatprep.subr.mxu0 0.0
    %1271 = vmatpush1.msra.mxu0 0.0
    %1272 = vmatprep.subr.mxu0 0.0
    %1273 = vmatpush1.msra.mxu0 0.0
    %1274 = vmatprep.subr.mxu0 0.0
    %1275 = vmatpush1.msra.mxu0 0.0
    %1276 = vmatprep.subr.mxu0 0.0
    %1277 = vmatpush1.msra.mxu0 0.0
    %1278 = vmatprep.subr.mxu0 0.0
    %1279 = vmatpush1.msra.mxu0 0.0
    %1280 = vmatprep.subr.mxu0 0.0
    %1281 = vmatpush1.msra.mxu0 0.0
    %1282 = vmatprep.subr.mxu0 0.0
    %1283 = vmatpush1.msra.mxu0 0.0
    %1284 = vmatprep.subr.mxu0 0.0
    %1285 = vmatpush1.msra.mxu0 0.0
    %1286 = vmatprep.subr.mxu0 0.0
    %1287 = vmatpush1.msra.mxu0 0.0
    %1288 = vmatprep.subr.mxu0 0.0
    %1289 = vmatpush1.msra.mxu0 0.0
    %1290 = vmatprep.subr.mxu0 0.0
    %1291 = vmatpush1.msra.mxu0 0.0
    %1292 = vmatprep.subr.mxu0 0.0
    %1293 = vmatpush1.msra.mxu0 0.0
    %1294 = vmatprep.subr.mxu0 0.0
    %1295 = vmatpush1.msra.mxu0 0.0
    %1296 = vmatprep.subr.mxu0 0.0
    %1297 = vmatpush1.msra.mxu0 0.0
    %1298 = vmatprep.subr.mxu0 0.0
    %1299 = vmatpush1.msra.mxu0 0.0
    %1300 = vmatprep.subr.mxu0 0.0
    %1301 = vmatpush1.msra.mxu0 0.0
    %1302 = vmatprep.subr.mxu0 0.0
    %1303 = vmatpush1.msra.mxu0 0.0
    %1304 = vmatprep.subr.mxu0 0.0
    %1305 = vmatpush1.msra.mxu0 0.0
    %1306 = vmatprep.subr.mxu0 0.0
    %1307 = vmatpush1.msra.mxu0 0.0
    %1308 = vmatprep.subr.mxu0 0.0
    %1309 = vmatpush1.msra.mxu0 0.0
    %1310 = vmatprep.subr.mxu0 0.0
    %1311 = vmatpush1.msra.mxu0 0.0
    %1312 = vmatprep.subr.mxu0 0.0
    %1313 = vmatpush1.msra.mxu0 0.0
    %1314 = vmatprep.subr.mxu0 0.0
    %1315 = vmatpush1.msra.mxu0 0.0
    %1316 = vmatprep.subr.mxu0 0.0
    %1317 = vmatpush1.msra.mxu0 0.0
    %1318 = vmatprep.subr.mxu0 0.0
    %1319 = vmatpush1.msra.mxu0 0.0
    %1320 = vmatprep.mubr.f32.mxu0 0.0
    %1321 = vmatmul.mubr.f32.gmra.mrb[0].mxu0 %v1254
    %v1322 = vpop.f32.mrb[0].mxu0
    %v1323 = vadd.f32 0.0, %v1322
    %v1324 = vpop.f32.mrb[0].mxu0
    %1325 = vdwg.mxu0
    %v1327 = vrot.slane %v1323, 6
    %v1329 = vadd.f32 %v1138, %v1327
    %v1330 = vxor.u32 %v1329, 2147483648
    %v1331 = vmul.f32 %v1330, 1.442695
    %v1332 = vpow.pop %v1331
    %v1333 = vadd.f32 %v1332, 1.0
    %v1334 = vrcp.pop %v1333
    %v1335 = vmul.f32 1.0, %v1334
    %v1336 = vadd.f32 %v1323, %v1229
    %v1338 = vrot.slane %v1336, 6
    %1339 = vrot.lane.b32.xlu0 %v1338, 64
    %v1340 = vpop.permute.xlu0 %1339
    %v1342 = vmul.f32 %v1335, %v1340
    %1344 = vrot.lane.b32.xlu0 %v1342, 64
    %v1345 = vpop.permute.xlu0 %1344
    %v1347 = vadd.f32 %v1138, %v1345
    %v1348 = vtanh.pop %v1347
    %v1349 = vsub.f32 1.0, %v1335
    %1351 = vrot.lane.b32.xlu0 %v1348, 96
    %v1352 = vpop.permute.xlu0 %1351
    %v1354 = vmul.f32 %v1349, %v1352
    %v1355 = vrot.slane %v1250, 6
    %v1357 = vmul.f32 %v1335, %v1355
    %v1358 = vadd.f32 %v1354, %v1357
    %v1360 = vrot.slane %v1358, 2
    %1361 = vrot.lane.b32.xlu0 %v1360, 96
    %v1362 = vpop.permute.xlu0 %1361
    %v1363 = vsel %vm149, %v1362, 0
    %1365 = vmatprep.subr.mxu0 0.0
    %1366 = vmatpush1.msra.mxu0 %v1051
    %1367 = vmatprep.subr.mxu0 0.0
    %1368 = vmatpush1.msra.mxu0 %v1052
    %1369 = vmatprep.subr.mxu0 0.0
    %1370 = vmatpush1.msra.mxu0 %v1053
    %1371 = vmatprep.subr.mxu0 0.0
    %1372 = vmatpush1.msra.mxu0 %v1054
    %1373 = vmatprep.subr.mxu0 0.0
    %1374 = vmatpush1.msra.mxu0 0.0
    %1375 = vmatprep.subr.mxu0 0.0
    %1376 = vmatpush1.msra.mxu0 0.0
    %1377 = vmatprep.subr.mxu0 0.0
    %1378 = vmatpush1.msra.mxu0 0.0
    %1379 = vmatprep.subr.mxu0 0.0
    %1380 = vmatpush1.msra.mxu0 0.0
    %1381 = vmatprep.subr.mxu0 0.0
    %1382 = vmatpush1.msra.mxu0 0.0
    %1383 = vmatprep.subr.mxu0 0.0
    %1384 = vmatpush1.msra.mxu0 0.0
    %1385 = vmatprep.subr.mxu0 0.0
    %1386 = vmatpush1.msra.mxu0 0.0
    %1387 = vmatprep.subr.mxu0 0.0
    %1388 = vmatpush1.msra.mxu0 0.0
    %1389 = vmatprep.subr.mxu0 0.0
    %1390 = vmatpush1.msra.mxu0 0.0
    %1391 = vmatprep.subr.mxu0 0.0
    %1392 = vmatpush1.msra.mxu0 0.0
    %1393 = vmatprep.subr.mxu0 0.0
    %1394 = vmatpush1.msra.mxu0 0.0
    %1395 = vmatprep.subr.mxu0 0.0
    %1396 = vmatpush1.msra.mxu0 0.0
    %1397 = vmatprep.subr.mxu0 0.0
    %1398 = vmatpush1.msra.mxu0 0.0
    %1399 = vmatprep.subr.mxu0 0.0
    %1400 = vmatpush1.msra.mxu0 0.0
    %1401 = vmatprep.subr.mxu0 0.0
    %1402 = vmatpush1.msra.mxu0 0.0
    %1403 = vmatprep.subr.mxu0 0.0
    %1404 = vmatpush1.msra.mxu0 0.0
    %1405 = vmatprep.subr.mxu0 0.0
    %1406 = vmatpush1.msra.mxu0 0.0
    %1407 = vmatprep.subr.mxu0 0.0
    %1408 = vmatpush1.msra.mxu0 0.0
    %1409 = vmatprep.subr.mxu0 0.0
    %1410 = vmatpush1.msra.mxu0 0.0
    %1411 = vmatprep.subr.mxu0 0.0
    %1412 = vmatpush1.msra.mxu0 0.0
    %1413 = vmatprep.subr.mxu0 0.0
    %1414 = vmatpush1.msra.mxu0 0.0
    %1415 = vmatprep.subr.mxu0 0.0
    %1416 = vmatpush1.msra.mxu0 0.0
    %1417 = vmatprep.subr.mxu0 0.0
    %1418 = vmatpush1.msra.mxu0 0.0
    %1419 = vmatprep.subr.mxu0 0.0
    %1420 = vmatpush1.msra.mxu0 0.0
    %1421 = vmatprep.subr.mxu0 0.0
    %1422 = vmatpush1.msra.mxu0 0.0
    %1423 = vmatprep.subr.mxu0 0.0
    %1424 = vmatpush1.msra.mxu0 0.0
    %1425 = vmatprep.subr.mxu0 0.0
    %1426 = vmatpush1.msra.mxu0 0.0
    %1427 = vmatprep.subr.mxu0 0.0
    %1428 = vmatpush1.msra.mxu0 0.0
    %1429 = vmatprep.mubr.f32.mxu0 0.0
    %1430 = vmatmul.mubr.f32.gmra.mrb[0].mxu0 %v1363
    %v1431 = vpop.f32.mrb[0].mxu0
    %v1432 = vadd.f32 0.0, %v1431
    %v1433 = vpop.f32.mrb[0].mxu0
    %1434 = vdwg.mxu0
    %v1436 = vrot.slane %v1432, 4
    %v1438 = vadd.f32 %v1138, %v1436
    %v1439 = vxor.u32 %v1438, 2147483648
    %v1440 = vmul.f32 %v1439, 1.442695
    %v1441 = vpow.pop %v1440
    %v1442 = vadd.f32 %v1441, 1.0
    %v1443 = vrcp.pop %v1442
    %v1444 = vmul.f32 1.0, %v1443
    %v1445 = vadd.f32 %v1432, %v1229
    %v1447 = vrot.slane %v1445, 4
    %1448 = vrot.lane.b32.xlu0 %v1447, 64
    %v1449 = vpop.permute.xlu0 %1448
    %v1451 = vmul.f32 %v1444, %v1449
    %1453 = vrot.lane.b32.xlu0 %v1451, 64
    %v1454 = vpop.permute.xlu0 %1453
    %v1456 = vadd.f32 %v1138, %v1454
    %v1457 = vtanh.pop %v1456
    %v1458 = vsub.f32 1.0, %v1444
    %1460 = vrot.lane.b32.xlu0 %v1457, 96
    %v1461 = vpop.permute.xlu0 %1460
    %v1463 = vmul.f32 %v1458, %v1461
    %v1464 = vrot.slane %v1358, 6
    %v1466 = vmul.f32 %v1444, %v1464
    %v1467 = vadd.f32 %v1463, %v1466
    %v1469 = vrot.slane %v1467, 4
    %1470 = vrot.lane.b32.xlu0 %v1469, 96
    %v1471 = vpop.permute.xlu0 %1470
    %v1472 = vsel %vm149, %v1471, 0
    %1474 = vmatprep.subr.mxu0 0.0
    %1475 = vmatpush1.msra.mxu0 %v1051
    %1476 = vmatprep.subr.mxu0 0.0
    %1477 = vmatpush1.msra.mxu0 %v1052
    %1478 = vmatprep.subr.mxu0 0.0
    %1479 = vmatpush1.msra.mxu0 %v1053
    %1480 = vmatprep.subr.mxu0 0.0
    %1481 = vmatpush1.msra.mxu0 %v1054
    %1482 = vmatprep.subr.mxu0 0.0
    %1483 = vmatpush1.msra.mxu0 0.0
    %1484 = vmatprep.subr.mxu0 0.0
    %1485 = vmatpush1.msra.mxu0 0.0
    %1486 = vmatprep.subr.mxu0 0.0
    %1487 = vmatpush1.msra.mxu0 0.0
    %1488 = vmatprep.subr.mxu0 0.0
    %1489 = vmatpush1.msra.mxu0 0.0
    %1490 = vmatprep.subr.mxu0 0.0
    %1491 = vmatpush1.msra.mxu0 0.0
    %1492 = vmatprep.subr.mxu0 0.0
    %1493 = vmatpush1.msra.mxu0 0.0
    %1494 = vmatprep.subr.mxu0 0.0
    %1495 = vmatpush1.msra.mxu0 0.0
    %1496 = vmatprep.subr.mxu0 0.0
    %1497 = vmatpush1.msra.mxu0 0.0
    %1498 = vmatprep.subr.mxu0 0.0
    %1499 = vmatpush1.msra.mxu0 0.0
    %1500 = vmatprep.subr.mxu0 0.0
    %1501 = vmatpush1.msra.mxu0 0.0
    %1502 = vmatprep.subr.mxu0 0.0
    %1503 = vmatpush1.msra.mxu0 0.0
    %1504 = vmatprep.subr.mxu0 0.0
    %1505 = vmatpush1.msra.mxu0 0.0
    %1506 = vmatprep.subr.mxu0 0.0
    %1507 = vmatpush1.msra.mxu0 0.0
    %1508 = vmatprep.subr.mxu0 0.0
    %1509 = vmatpush1.msra.mxu0 0.0
    %1510 = vmatprep.subr.mxu0 0.0
    %1511 = vmatpush1.msra.mxu0 0.0
    %1512 = vmatprep.subr.mxu0 0.0
    %1513 = vmatpush1.msra.mxu0 0.0
    %1514 = vmatprep.subr.mxu0 0.0
    %1515 = vmatpush1.msra.mxu0 0.0
    %1516 = vmatprep.subr.mxu0 0.0
    %1517 = vmatpush1.msra.mxu0 0.0
    %1518 = vmatprep.subr.mxu0 0.0
    %1519 = vmatpush1.msra.mxu0 0.0
    %1520 = vmatprep.subr.mxu0 0.0
    %1521 = vmatpush1.msra.mxu0 0.0
    %1522 = vmatprep.subr.mxu0 0.0
    %1523 = vmatpush1.msra.mxu0 0.0
    %1524 = vmatprep.subr.mxu0 0.0
    %1525 = vmatpush1.msra.mxu0 0.0
    %1526 = vmatprep.subr.mxu0 0.0
    %1527 = vmatpush1.msra.mxu0 0.0
    %1528 = vmatprep.subr.mxu0 0.0
    %1529 = vmatpush1.msra.mxu0 0.0
    %1530 = vmatprep.subr.mxu0 0.0
    %1531 = vmatpush1.msra.mxu0 0.0
    %1532 = vmatprep.subr.mxu0 0.0
    %1533 = vmatpush1.msra.mxu0 0.0
    %1534 = vmatprep.subr.mxu0 0.0
    %1535 = vmatpush1.msra.mxu0 0.0
    %1536 = vmatprep.subr.mxu0 0.0
    %1537 = vmatpush1.msra.mxu0 0.0
    %1538 = vmatprep.mubr.f32.mxu0 0.0
    %1539 = vmatmul.mubr.f32.gmra.mrb[0].mxu0 %v1472
    %v1540 = vpop.f32.mrb[0].mxu0
    %v1541 = vadd.f32 0.0, %v1540
    %v1542 = vpop.f32.mrb[0].mxu0
    %1543 = vdwg.mxu0
    %v1545 = vrot.slane %v1541, 2
    %v1547 = vadd.f32 %v1138, %v1545
    %v1548 = vxor.u32 %v1547, 2147483648
    %v1549 = vmul.f32 %v1548, 1.442695
    %v1550 = vpow.pop %v1549
    %v1551 = vadd.f32 %v1550, 1.0
    %v1552 = vrcp.pop %v1551
    %v1553 = vmul.f32 1.0, %v1552
    %v1554 = vadd.f32 %v1541, %v1229
    %v1556 = vrot.slane %v1554, 2
    %1557 = vrot.lane.b32.xlu0 %v1556, 64
    %v1558 = vpop.permute.xlu0 %1557
    %v1560 = vmul.f32 %v1553, %v1558
    %1562 = vrot.lane.b32.xlu0 %v1560, 64
    %v1563 = vpop.permute.xlu0 %1562
    %v1565 = vadd.f32 %v1138, %v1563
    %v1566 = vtanh.pop %v1565
    %v1567 = vsub.f32 1.0, %v1553
    %1569 = vrot.lane.b32.xlu0 %v1566, 96
    %v1570 = vpop.permute.xlu0 %1569
    %v1572 = vmul.f32 %v1567, %v1570
    %v1573 = vrot.slane %v1467, 6
    %v1575 = vmul.f32 %v1553, %v1573
    %v1576 = vadd.f32 %v1572, %v1575
    %v1578 = vrot.slane %v1576, 6
    %1579 = vrot.lane.b32.xlu0 %v1578, 96
    %v1580 = vpop.permute.xlu0 %1579
    %v1581 = vsel %vm149, %v1580, 0
    %1583 = vmatprep.subr.mxu0 0.0
    %1584 = vmatpush1.msra.mxu0 %v1051
    %1585 = vmatprep.subr.mxu0 0.0
    %1586 = vmatpush1.msra.mxu0 %v1052
    %1587 = vmatprep.subr.mxu0 0.0
    %1588 = vmatpush1.msra.mxu0 %v1053
    %1589 = vmatprep.subr.mxu0 0.0
    %1590 = vmatpush1.msra.mxu0 %v1054
    %1591 = vmatprep.subr.mxu0 0.0
    %1592 = vmatpush1.msra.mxu0 0.0
    %1593 = vmatprep.subr.mxu0 0.0
    %1594 = vmatpush1.msra.mxu0 0.0
    %1595 = vmatprep.subr.mxu0 0.0
    %1596 = vmatpush1.msra.mxu0 0.0
    %1597 = vmatprep.subr.mxu0 0.0
    %1598 = vmatpush1.msra.mxu0 0.0
    %1599 = vmatprep.subr.mxu0 0.0
    %1600 = vmatpush1.msra.mxu0 0.0
    %1601 = vmatprep.subr.mxu0 0.0
    %1602 = vmatpush1.msra.mxu0 0.0
    %1603 = vmatprep.subr.mxu0 0.0
    %1604 = vmatpush1.msra.mxu0 0.0
    %1605 = vmatprep.subr.mxu0 0.0
    %1606 = vmatpush1.msra.mxu0 0.0
    %1607 = vmatprep.subr.mxu0 0.0
    %1608 = vmatpush1.msra.mxu0 0.0
    %1609 = vmatprep.subr.mxu0 0.0
    %1610 = vmatpush1.msra.mxu0 0.0
    %1611 = vmatprep.subr.mxu0 0.0
    %1612 = vmatpush1.msra.mxu0 0.0
    %1613 = vmatprep.subr.mxu0 0.0
    %1614 = vmatpush1.msra.mxu0 0.0
    %1615 = vmatprep.subr.mxu0 0.0
    %1616 = vmatpush1.msra.mxu0 0.0
    %1617 = vmatprep.subr.mxu0 0.0
    %1618 = vmatpush1.msra.mxu0 0.0
    %1619 = vmatprep.subr.mxu0 0.0
    %1620 = vmatpush1.msra.mxu0 0.0
    %1621 = vmatprep.subr.mxu0 0.0
    %1622 = vmatpush1.msra.mxu0 0.0
    %1623 = vmatprep.subr.mxu0 0.0
    %1624 = vmatpush1.msra.mxu0 0.0
    %1625 = vmatprep.subr.mxu0 0.0
    %1626 = vmatpush1.msra.mxu0 0.0
    %1627 = vmatprep.subr.mxu0 0.0
    %1628 = vmatpush1.msra.mxu0 0.0
    %1629 = vmatprep.subr.mxu0 0.0
    %1630 = vmatpush1.msra.mxu0 0.0
    %1631 = vmatprep.subr.mxu0 0.0
    %1632 = vmatpush1.msra.mxu0 0.0
    %1633 = vmatprep.subr.mxu0 0.0
    %1634 = vmatpush1.msra.mxu0 0.0
    %1635 = vmatprep.subr.mxu0 0.0
    %1636 = vmatpush1.msra.mxu0 0.0
    %1637 = vmatprep.subr.mxu0 0.0
    %1638 = vmatpush1.msra.mxu0 0.0
    %1639 = vmatprep.subr.mxu0 0.0
    %1640 = vmatpush1.msra.mxu0 0.0
    %1641 = vmatprep.subr.mxu0 0.0
    %1642 = vmatpush1.msra.mxu0 0.0
    %1643 = vmatprep.subr.mxu0 0.0
    %1644 = vmatpush1.msra.mxu0 0.0
    %1645 = vmatprep.subr.mxu0 0.0
    %1646 = vmatpush1.msra.mxu0 0.0
    %1647 = vmatprep.mubr.f32.mxu0 0.0
    %1648 = vmatmul.mubr.f32.gmra.mrb[0].mxu0 %v1581
    %v1649 = vpop.f32.mrb[0].mxu0
    %v1650 = vadd.f32 0.0, %v1649
    %v1651 = vpop.f32.mrb[0].mxu0
    %1652 = vdwg.mxu0
    %v1653 = vadd.f32 %v1143, %v1650
    %v1654 = vxor.u32 %v1653, 2147483648
    %v1655 = vmul.f32 %v1654, 1.442695
    %v1656 = vpow.pop %v1655
    %v1657 = vadd.f32 %v1656, 1.0
    %v1658 = vrcp.pop %v1657
    %v1659 = vmul.f32 1.0, %v1658
    %v1660 = vadd.f32 %v1650, %v1229
    %1662 = vrot.lane.b32.xlu0 %v1660, 64
    %v1663 = vpop.permute.xlu0 %1662
    %v1665 = vmul.f32 %v1659, %v1663
    %1667 = vrot.lane.b32.xlu0 %v1665, 64
    %v1668 = vpop.permute.xlu0 %1667
    %v1670 = vadd.f32 %v1143, %v1668
    %v1671 = vtanh.pop %v1670
    %v1672 = vsub.f32 1.0, %v1659
    %1674 = vrot.lane.b32.xlu0 %v1671, 96
    %v1675 = vpop.permute.xlu0 %1674
    %v1677 = vmul.f32 %v1672, %v1675
    %v1679 = vmul.f32 %v1659, %v1578
    %v1680 = vadd.f32 %v1677, %v1679
    %1682 = vrot.lane.b32.xlu0 %v1680, 96
    %v1683 = vpop.permute.xlu0 %1682
    %v1684 = vsel %vm149, %v1683, 0
    %1686 = vmatprep.subr.mxu0 0.0
    %1687 = vmatpush1.msra.mxu0 %v1051
    %1688 = vmatprep.subr.mxu0 0.0
    %1689 = vmatpush1.msra.mxu0 %v1052
    %1690 = vmatprep.subr.mxu0 0.0
    %1691 = vmatpush1.msra.mxu0 %v1053
    %1692 = vmatprep.subr.mxu0 0.0
    %1693 = vmatpush1.msra.mxu0 %v1054
    %1694 = vmatprep.subr.mxu0 0.0
    %1695 = vmatpush1.msra.mxu0 0.0
    %1696 = vmatprep.subr.mxu0 0.0
    %1697 = vmatpush1.msra.mxu0 0.0
    %1698 = vmatprep.subr.mxu0 0.0
    %1699 = vmatpush1.msra.mxu0 0.0
    %1700 = vmatprep.subr.mxu0 0.0
    %1701 = vmatpush1.msra.mxu0 0.0
    %1702 = vmatprep.subr.mxu0 0.0
    %1703 = vmatpush1.msra.mxu0 0.0
    %1704 = vmatprep.subr.mxu0 0.0
    %1705 = vmatpush1.msra.mxu0 0.0
    %1706 = vmatprep.subr.mxu0 0.0
    %1707 = vmatpush1.msra.mxu0 0.0
    %1708 = vmatprep.subr.mxu0 0.0
    %1709 = vmatpush1.msra.mxu0 0.0
    %1710 = vmatprep.subr.mxu0 0.0
    %1711 = vmatpush1.msra.mxu0 0.0
    %1712 = vmatprep.subr.mxu0 0.0
    %1713 = vmatpush1.msra.mxu0 0.0
    %1714 = vmatprep.subr.mxu0 0.0
    %1715 = vmatpush1.msra.mxu0 0.0
    %1716 = vmatprep.subr.mxu0 0.0
    %1717 = vmatpush1.msra.mxu0 0.0
    %1718 = vmatprep.subr.mxu0 0.0
    %1719 = vmatpush1.msra.mxu0 0.0
    %1720 = vmatprep.subr.mxu0 0.0
    %1721 = vmatpush1.msra.mxu0 0.0
    %1722 = vmatprep.subr.mxu0 0.0
    %1723 = vmatpush1.msra.mxu0 0.0
    %1724 = vmatprep.subr.mxu0 0.0
    %1725 = vmatpush1.msra.mxu0 0.0
    %1726 = vmatprep.subr.mxu0 0.0
    %1727 = vmatpush1.msra.mxu0 0.0
    %1728 = vmatprep.subr.mxu0 0.0
    %1729 = vmatpush1.msra.mxu0 0.0
    %1730 = vmatprep.subr.mxu0 0.0
    %1731 = vmatpush1.msra.mxu0 0.0
    %1732 = vmatprep.subr.mxu0 0.0
    %1733 = vmatpush1.msra.mxu0 0.0
    %1734 = vmatprep.subr.mxu0 0.0
    %1735 = vmatpush1.msra.mxu0 0.0
    %1736 = vmatprep.subr.mxu0 0.0
    %1737 = vmatpush1.msra.mxu0 0.0
    %1738 = vmatprep.subr.mxu0 0.0
    %1739 = vmatpush1.msra.mxu0 0.0
    %1740 = vmatprep.subr.mxu0 0.0
    %1741 = vmatpush1.msra.mxu0 0.0
    %1742 = vmatprep.subr.mxu0 0.0
    %1743 = vmatpush1.msra.mxu0 0.0
    %1744 = vmatprep.subr.mxu0 0.0
    %1745 = vmatpush1.msra.mxu0 0.0
    %1746 = vmatprep.subr.mxu0 0.0
    %1747 = vmatpush1.msra.mxu0 0.0
    %1748 = vmatprep.subr.mxu0 0.0
    %1749 = vmatpush1.msra.mxu0 0.0
    %1750 = vmatprep.mubr.f32.mxu0 0.0
    %1751 = vmatmul.mubr.f32.gmra.mrb[0].mxu0 %v1684
    %v1752 = vpop.f32.mrb[0].mxu0
    %v1753 = vadd.f32 0.0, %v1752
    %v1754 = vpop.f32.mrb[0].mxu0
    %1755 = vdwg.mxu0
    %v1757 = vrot.slane %v1753, 6
    %v1759 = vadd.f32 %v1143, %v1757
    %v1760 = vxor.u32 %v1759, 2147483648
    %v1761 = vmul.f32 %v1760, 1.442695
    %v1762 = vpow.pop %v1761
    %v1763 = vadd.f32 %v1762, 1.0
    %v1764 = vrcp.pop %v1763
    %v1765 = vmul.f32 1.0, %v1764
    %v1766 = vadd.f32 %v1753, %v1229
    %v1768 = vrot.slane %v1766, 6
    %1769 = vrot.lane.b32.xlu0 %v1768, 64
    %v1770 = vpop.permute.xlu0 %1769
    %v1772 = vmul.f32 %v1765, %v1770
    %1774 = vrot.lane.b32.xlu0 %v1772, 64
    %v1775 = vpop.permute.xlu0 %1774
    %v1777 = vadd.f32 %v1143, %v1775
    %v1778 = vtanh.pop %v1777
    %v1779 = vsub.f32 1.0, %v1765
    %1781 = vrot.lane.b32.xlu0 %v1778, 96
    %v1782 = vpop.permute.xlu0 %1781
    %v1784 = vmul.f32 %v1779, %v1782
    %v1785 = vrot.slane %v1680, 6
    %v1787 = vmul.f32 %v1765, %v1785
    %v1788 = vadd.f32 %v1784, %v1787
    %v1790 = vrot.slane %v1788, 2
    %1791 = vrot.lane.b32.xlu0 %v1790, 96
    %v1792 = vpop.permute.xlu0 %1791
    %v1793 = vsel %vm149, %v1792, 0
    %1795 = vmatprep.subr.mxu0 0.0
    %1796 = vmatpush1.msra.mxu0 %v1051
    %1797 = vmatprep.subr.mxu0 0.0
    %1798 = vmatpush1.msra.mxu0 %v1052
    %1799 = vmatprep.subr.mxu0 0.0
    %1800 = vmatpush1.msra.mxu0 %v1053
    %1801 = vmatprep.subr.mxu0 0.0
    %1802 = vmatpush1.msra.mxu0 %v1054
    %1803 = vmatprep.subr.mxu0 0.0
    %1804 = vmatpush1.msra.mxu0 0.0
    %1805 = vmatprep.subr.mxu0 0.0
    %1806 = vmatpush1.msra.mxu0 0.0
    %1807 = vmatprep.subr.mxu0 0.0
    %1808 = vmatpush1.msra.mxu0 0.0
    %1809 = vmatprep.subr.mxu0 0.0
    %1810 = vmatpush1.msra.mxu0 0.0
    %1811 = vmatprep.subr.mxu0 0.0
    %1812 = vmatpush1.msra.mxu0 0.0
    %1813 = vmatprep.subr.mxu0 0.0
    %1814 = vmatpush1.msra.mxu0 0.0
    %1815 = vmatprep.subr.mxu0 0.0
    %1816 = vmatpush1.msra.mxu0 0.0
    %1817 = vmatprep.subr.mxu0 0.0
    %1818 = vmatpush1.msra.mxu0 0.0
    %1819 = vmatprep.subr.mxu0 0.0
    %1820 = vmatpush1.msra.mxu0 0.0
    %1821 = vmatprep.subr.mxu0 0.0
    %1822 = vmatpush1.msra.mxu0 0.0
    %1823 = vmatprep.subr.mxu0 0.0
    %1824 = vmatpush1.msra.mxu0 0.0
    %1825 = vmatprep.subr.mxu0 0.0
    %1826 = vmatpush1.msra.mxu0 0.0
    %1827 = vmatprep.subr.mxu0 0.0
    %1828 = vmatpush1.msra.mxu0 0.0
    %1829 = vmatprep.subr.mxu0 0.0
    %1830 = vmatpush1.msra.mxu0 0.0
    %1831 = vmatprep.subr.mxu0 0.0
    %1832 = vmatpush1.msra.mxu0 0.0
    %1833 = vmatprep.subr.mxu0 0.0
    %1834 = vmatpush1.msra.mxu0 0.0
    %1835 = vmatprep.subr.mxu0 0.0
    %1836 = vmatpush1.msra.mxu0 0.0
    %1837 = vmatprep.subr.mxu0 0.0
    %1838 = vmatpush1.msra.mxu0 0.0
    %1839 = vmatprep.subr.mxu0 0.0
    %1840 = vmatpush1.msra.mxu0 0.0
    %1841 = vmatprep.subr.mxu0 0.0
    %1842 = vmatpush1.msra.mxu0 0.0
    %1843 = vmatprep.subr.mxu0 0.0
    %1844 = vmatpush1.msra.mxu0 0.0
    %1845 = vmatprep.subr.mxu0 0.0
    %1846 = vmatpush1.msra.mxu0 0.0
    %1847 = vmatprep.subr.mxu0 0.0
    %1848 = vmatpush1.msra.mxu0 0.0
    %1849 = vmatprep.subr.mxu0 0.0
    %1850 = vmatpush1.msra.mxu0 0.0
    %1851 = vmatprep.subr.mxu0 0.0
    %1852 = vmatpush1.msra.mxu0 0.0
    %1853 = vmatprep.subr.mxu0 0.0
    %1854 = vmatpush1.msra.mxu0 0.0
    %1855 = vmatprep.subr.mxu0 0.0
    %1856 = vmatpush1.msra.mxu0 0.0
    %1857 = vmatprep.subr.mxu0 0.0
    %1858 = vmatpush1.msra.mxu0 0.0
    %1859 = vmatprep.mubr.f32.mxu0 0.0
    %1860 = vmatmul.mubr.f32.gmra.mrb[0].mxu0 %v1793
    %v1861 = vpop.f32.mrb[0].mxu0
    %v1862 = vadd.f32 0.0, %v1861
    %v1863 = vpop.f32.mrb[0].mxu0
    %1864 = vdwg.mxu0
    %v1866 = vrot.slane %v1862, 4
    %v1868 = vadd.f32 %v1143, %v1866
    %v1869 = vxor.u32 %v1868, 2147483648
    %v1870 = vmul.f32 %v1869, 1.442695
    %v1871 = vpow.pop %v1870
    %v1872 = vadd.f32 %v1871, 1.0
    %v1873 = vrcp.pop %v1872
    %v1874 = vmul.f32 1.0, %v1873
    %v1875 = vadd.f32 %v1862, %v1229
    %v1877 = vrot.slane %v1875, 4
    %1878 = vrot.lane.b32.xlu0 %v1877, 64
    %v1879 = vpop.permute.xlu0 %1878
    %v1881 = vmul.f32 %v1874, %v1879
    %1883 = vrot.lane.b32.xlu0 %v1881, 64
    %v1884 = vpop.permute.xlu0 %1883
    %v1886 = vadd.f32 %v1143, %v1884
    %v1887 = vtanh.pop %v1886
    %v1888 = vsub.f32 1.0, %v1874
    %1890 = vrot.lane.b32.xlu0 %v1887, 96
    %v1891 = vpop.permute.xlu0 %1890
    %v1893 = vmul.f32 %v1888, %v1891
    %v1894 = vrot.slane %v1788, 6
    %v1896 = vmul.f32 %v1874, %v1894
    %v1897 = vadd.f32 %v1893, %v1896
    %v1899 = vrot.slane %v1897, 4
    %1900 = vrot.lane.b32.xlu0 %v1899, 96
    %v1901 = vpop.permute.xlu0 %1900
    %v1902 = vsel %vm149, %v1901, 0
    %1904 = vmatprep.subr.mxu0 0.0
    %1905 = vmatpush1.msra.mxu0 %v1051
    %1906 = vmatprep.subr.mxu0 0.0
    %1907 = vmatpush1.msra.mxu0 %v1052
    %1908 = vmatprep.subr.mxu0 0.0
    %1909 = vmatpush1.msra.mxu0 %v1053
    %1910 = vmatprep.subr.mxu0 0.0
    %1911 = vmatpush1.msra.mxu0 %v1054
    %1912 = vmatprep.subr.mxu0 0.0
    %1913 = vmatpush1.msra.mxu0 0.0
    %1914 = vmatprep.subr.mxu0 0.0
    %1915 = vmatpush1.msra.mxu0 0.0
    %1916 = vmatprep.subr.mxu0 0.0
    %1917 = vmatpush1.msra.mxu0 0.0
    %1918 = vmatprep.subr.mxu0 0.0
    %1919 = vmatpush1.msra.mxu0 0.0
    %1920 = vmatprep.subr.mxu0 0.0
    %1921 = vmatpush1.msra.mxu0 0.0
    %1922 = vmatprep.subr.mxu0 0.0
    %1923 = vmatpush1.msra.mxu0 0.0
    %1924 = vmatprep.subr.mxu0 0.0
    %1925 = vmatpush1.msra.mxu0 0.0
    %1926 = vmatprep.subr.mxu0 0.0
    %1927 = vmatpush1.msra.mxu0 0.0
    %1928 = vmatprep.subr.mxu0 0.0
    %1929 = vmatpush1.msra.mxu0 0.0
    %1930 = vmatprep.subr.mxu0 0.0
    %1931 = vmatpush1.msra.mxu0 0.0
    %1932 = vmatprep.subr.mxu0 0.0
    %1933 = vmatpush1.msra.mxu0 0.0
    %1934 = vmatprep.subr.mxu0 0.0
    %1935 = vmatpush1.msra.mxu0 0.0
    %1936 = vmatprep.subr.mxu0 0.0
    %1937 = vmatpush1.msra.mxu0 0.0
    %1938 = vmatprep.subr.mxu0 0.0
    %1939 = vmatpush1.msra.mxu0 0.0
    %1940 = vmatprep.subr.mxu0 0.0
    %1941 = vmatpush1.msra.mxu0 0.0
    %1942 = vmatprep.subr.mxu0 0.0
    %1943 = vmatpush1.msra.mxu0 0.0
    %1944 = vmatprep.subr.mxu0 0.0
    %1945 = vmatpush1.msra.mxu0 0.0
    %1946 = vmatprep.subr.mxu0 0.0
    %1947 = vmatpush1.msra.mxu0 0.0
    %1948 = vmatprep.subr.mxu0 0.0
    %1949 = vmatpush1.msra.mxu0 0.0
    %1950 = vmatprep.subr.mxu0 0.0
    %1951 = vmatpush1.msra.mxu0 0.0
    %1952 = vmatprep.subr.mxu0 0.0
    %1953 = vmatpush1.msra.mxu0 0.0
    %1954 = vmatprep.subr.mxu0 0.0
    %1955 = vmatpush1.msra.mxu0 0.0
    %1956 = vmatprep.subr.mxu0 0.0
    %1957 = vmatpush1.msra.mxu0 0.0
    %1958 = vmatprep.subr.mxu0 0.0
    %1959 = vmatpush1.msra.mxu0 0.0
    %1960 = vmatprep.subr.mxu0 0.0
    %1961 = vmatpush1.msra.mxu0 0.0
    %1962 = vmatprep.subr.mxu0 0.0
    %1963 = vmatpush1.msra.mxu0 0.0
    %1964 = vmatprep.subr.mxu0 0.0
    %1965 = vmatpush1.msra.mxu0 0.0
    %1966 = vmatprep.subr.mxu0 0.0
    %1967 = vmatpush1.msra.mxu0 0.0
    %1968 = vmatprep.mubr.f32.mxu0 0.0
    %1969 = vmatmul.mubr.f32.gmra.mrb[0].mxu0 %v1902
    %v1970 = vpop.f32.mrb[0].mxu0
    %v1971 = vadd.f32 0.0, %v1970
    %v1972 = vpop.f32.mrb[0].mxu0
    %1973 = vdwg.mxu0
    %v1975 = vrot.slane %v1971, 2
    %v1977 = vadd.f32 %v1143, %v1975
    %v1978 = vxor.u32 %v1977, 2147483648
    %v1979 = vmul.f32 %v1978, 1.442695
    %v1980 = vpow.pop %v1979
    %v1981 = vadd.f32 %v1980, 1.0
    %v1982 = vrcp.pop %v1981
    %v1983 = vmul.f32 1.0, %v1982
    %v1984 = vadd.f32 %v1971, %v1229
    %v1986 = vrot.slane %v1984, 2
    %1987 = vrot.lane.b32.xlu0 %v1986, 64
    %v1988 = vpop.permute.xlu0 %1987
    %v1990 = vmul.f32 %v1983, %v1988
    %1992 = vrot.lane.b32.xlu0 %v1990, 64
    %v1993 = vpop.permute.xlu0 %1992
    %v1995 = vadd.f32 %v1143, %v1993
    %v1996 = vtanh.pop %v1995
    %v1997 = vsub.f32 1.0, %v1983
    %1999 = vrot.lane.b32.xlu0 %v1996, 96
    %v2000 = vpop.permute.xlu0 %1999
    %v2002 = vmul.f32 %v1997, %v2000
    %v2003 = vrot.slane %v1897, 6
    %v2005 = vmul.f32 %v1983, %v2003
    %v2006 = vadd.f32 %v2002, %v2005
    %v2007 = vld [vmem:[%s9] sm:$0xff]
    %v2008 = vld [vmem:[%s9 + $0x8] sm:$0xff]
    %v2009 = vld [vmem:[%s9 + $0x10] sm:$0xff]
    %v2010 = vld [vmem:[%s9 + $0x18] sm:$0xff]
    %v2011 = vld [vmem:[#allocation3] sm:$0x1]
    %v2013 = vlaneseq
    %v2014 = vshrl.u32 %v2013, 7
    %v2015 = vsub.s32 0, %v2014
    %v2016 = vrot.slane %v2011, %v2015
    %v2019 = vrot.slane %v2006, 6
    %2020 = vrot.lane.b32.xlu0 %v2019, 96
    %v2021 = vpop.permute.xlu0 %2020
    %v2022 = vsel %vm149, %v2021, 0
    %2024 = vmatprep.subr.mxu0 0.0
    %2025 = vmatpush1.msra.mxu0 %v2007
    %2026 = vmatprep.subr.mxu0 0.0
    %2027 = vmatpush1.msra.mxu0 %v2008
    %2028 = vmatprep.subr.mxu0 0.0
    %2029 = vmatpush1.msra.mxu0 %v2009
    %2030 = vmatprep.subr.mxu0 0.0
    %2031 = vmatpush1.msra.mxu0 %v2010
    %2032 = vmatprep.subr.mxu0 0.0
    %2033 = vmatpush1.msra.mxu0 0.0
    %2034 = vmatprep.subr.mxu0 0.0
    %2035 = vmatpush1.msra.mxu0 0.0
    %2036 = vmatprep.subr.mxu0 0.0
    %2037 = vmatpush1.msra.mxu0 0.0
    %2038 = vmatprep.subr.mxu0 0.0
    %2039 = vmatpush1.msra.mxu0 0.0
    %2040 = vmatprep.subr.mxu0 0.0
    %2041 = vmatpush1.msra.mxu0 0.0
    %2042 = vmatprep.subr.mxu0 0.0
    %2043 = vmatpush1.msra.mxu0 0.0
    %2044 = vmatprep.subr.mxu0 0.0
    %2045 = vmatpush1.msra.mxu0 0.0
    %2046 = vmatprep.subr.mxu0 0.0
    %2047 = vmatpush1.msra.mxu0 0.0
    %2048 = vmatprep.subr.mxu0 0.0
    %2049 = vmatpush1.msra.mxu0 0.0
    %2050 = vmatprep.subr.mxu0 0.0
    %2051 = vmatpush1.msra.mxu0 0.0
    %2052 = vmatprep.subr.mxu0 0.0
    %2053 = vmatpush1.msra.mxu0 0.0
    %2054 = vmatprep.subr.mxu0 0.0
    %2055 = vmatpush1.msra.mxu0 0.0
    %2056 = vmatprep.subr.mxu0 0.0
    %2057 = vmatpush1.msra.mxu0 0.0
    %2058 = vmatprep.subr.mxu0 0.0
    %2059 = vmatpush1.msra.mxu0 0.0
    %2060 = vmatprep.subr.mxu0 0.0
    %2061 = vmatpush1.msra.mxu0 0.0
    %2062 = vmatprep.subr.mxu0 0.0
    %2063 = vmatpush1.msra.mxu0 0.0
    %2064 = vmatprep.subr.mxu0 0.0
    %2065 = vmatpush1.msra.mxu0 0.0
    %2066 = vmatprep.subr.mxu0 0.0
    %2067 = vmatpush1.msra.mxu0 0.0
    %2068 = vmatprep.subr.mxu0 0.0
    %2069 = vmatpush1.msra.mxu0 0.0
    %2070 = vmatprep.subr.mxu0 0.0
    %2071 = vmatpush1.msra.mxu0 0.0
    %2072 = vmatprep.subr.mxu0 0.0
    %2073 = vmatpush1.msra.mxu0 0.0
    %2074 = vmatprep.subr.mxu0 0.0
    %2075 = vmatpush1.msra.mxu0 0.0
    %2076 = vmatprep.subr.mxu0 0.0
    %2077 = vmatpush1.msra.mxu0 0.0
    %2078 = vmatprep.subr.mxu0 0.0
    %2079 = vmatpush1.msra.mxu0 0.0
    %2080 = vmatprep.subr.mxu0 0.0
    %2081 = vmatpush1.msra.mxu0 0.0
    %2082 = vmatprep.subr.mxu0 0.0
    %2083 = vmatpush1.msra.mxu0 0.0
    %2084 = vmatprep.subr.mxu0 0.0
    %2085 = vmatpush1.msra.mxu0 0.0
    %2086 = vmatprep.subr.mxu0 0.0
    %2087 = vmatpush1.msra.mxu0 0.0
    %2088 = vmatprep.mubr.f32.mxu0 0.0
    %2089 = vmatmul.mubr.f32.gmra.mrb[0].mxu0 %v2022
    %v2090 = vpop.f32.mrb[0].mxu0
    %v2091 = vadd.f32 %v2016, %v2090
    %v2092 = vpop.f32.mrb[0].mxu0
    %2093 = vdwg.mxu0
    %vm2094 = vcmask 1024
    %2095 = vst.msk [vmem:[%s11] sm:$0x3] %vm2094, %v2091
    // Predicated region
    $region50: #{gru_fc_forward.1} parent=1 // pred_check
      _
    $region51: #{gru_fc_forward.1} parent=1 // pred_check_branch
      %2097 = sbr.rel (0) target = $region53
    $region52: #{gru_fc_forward.1} parent=1 // pred_region
      _
    $region53: #{gru_fc_forward.1} parent=1 // pred_fallthru
      _
    // Predicated region
    $region54: #{gru_fc_forward.1} parent=1 // pred_check
      _
    $region55: #{gru_fc_forward.1} parent=1 // pred_check_branch
      %2099 = sbr.rel (0) target = $region57
    $region56: #{gru_fc_forward.1} parent=1 // pred_region
      _
    $region57: #{gru_fc_forward.1} parent=1 // pred_fallthru
      _
    %2100 = vsyncpa [#allocation5], 1

</llo_original>
